<compile_context>
chip_gen: v6e
topology: v6e:2x2x1
jax: 0.10.0
libtpu: 0.0.40
codegen_flags: <defaults>
</compile_context>

<pallas_src>
import functools

import jax
import jax.numpy as jnp
from jax import lax
from jax.experimental import pallas as pl
from jax.experimental.pallas import tpu as pltpu

_TILE = 256   # row / contraction tile for large graphs (multiple of 128)
_LANE = 128   # feature padding target (vreg lane width) and min node tile


def _round_up(x, m):
    return ((x + m - 1) // m) * m


def _pick_tile(n):
    # Smallest legal tile for tiny graphs (less wasted padding); 256 otherwise
    # (big enough to amortize the ~0.35us per-grid-step overhead).
    return _LANE if n <= _LANE else _TILE


# ---------------------------------------------------------------------------
# Kernel: feature transform   out = epilogue(P @ W + b)
# grid = (row_tiles,); weights / bias resident in VMEM across the whole call.
# ---------------------------------------------------------------------------
def _transform_kernel(p_ref, w_ref, b_ref, out_ref, *, relu):
    h = jnp.dot(p_ref[...], w_ref[...], preferred_element_type=jnp.float32)
    h = h + b_ref[...]
    if relu:
        h = jnp.maximum(h, 0.0)
    out_ref[...] = h


def transform(p, w, b, *, relu, tile_m):
    n_pad, f_in = p.shape
    f_out = w.shape[1]
    return pl.pallas_call(
        functools.partial(_transform_kernel, relu=relu),
        out_shape=jax.ShapeDtypeStruct((n_pad, f_out), jnp.float32),
        grid=(n_pad // tile_m,),
        in_specs=[
            pl.BlockSpec((tile_m, f_in), lambda i: (i, 0)),
            pl.BlockSpec((f_in, f_out), lambda i: (0, 0)),
            pl.BlockSpec((1, f_out), lambda i: (0, 0)),
        ],
        out_specs=pl.BlockSpec((tile_m, f_out), lambda i: (i, 0)),
        compiler_params=pltpu.CompilerParams(
            dimension_semantics=("parallel",)),
    )(p, w, b)


# ---------------------------------------------------------------------------
# Kernel: propagation   out = epilogue(adj @ P + b)   (adj is row-normalized)
# grid = (row_tiles, k_tiles); k is the contraction axis, accumulated in VMEM.
# ---------------------------------------------------------------------------
def _propagate_kernel(adj_ref, p_ref, b_ref, out_ref, acc_ref, *,
                      relu, log_softmax_cols):
    k = pl.program_id(1)

    @pl.when(k == 0)
    def _():
        acc_ref[...] = jnp.zeros_like(acc_ref)

    acc_ref[...] += jnp.dot(adj_ref[...], p_ref[...],
                            preferred_element_type=jnp.float32)

    @pl.when(k == pl.num_programs(1) - 1)
    def _():
        h = acc_ref[...] + b_ref[...]
        if relu:
            h = jnp.maximum(h, 0.0)
        if log_softmax_cols is not None:
            # Mask padded feature columns out of the softmax normalization.
            col = lax.broadcasted_iota(jnp.int32, h.shape, 1)
            h = jnp.where(col < log_softmax_cols, h, -1e30)
            m = jnp.max(h, axis=-1, keepdims=True)
            shifted = h - m
            lse = jnp.log(jnp.sum(jnp.exp(shifted), axis=-1, keepdims=True))
            h = shifted - lse
        out_ref[...] = h


def propagate(adj, p, b, *, relu, log_softmax_cols, tile_m, tile_k):
    n_pad = adj.shape[0]
    f = p.shape[1]
    return pl.pallas_call(
        functools.partial(_propagate_kernel, relu=relu,
                          log_softmax_cols=log_softmax_cols),
        out_shape=jax.ShapeDtypeStruct((n_pad, f), jnp.float32),
        grid=(n_pad // tile_m, n_pad // tile_k),
        in_specs=[
            pl.BlockSpec((tile_m, tile_k), lambda i, k: (i, k)),
            pl.BlockSpec((tile_k, f), lambda i, k: (k, 0)),
            pl.BlockSpec((1, f), lambda i, k: (0, 0)),
        ],
        out_specs=pl.BlockSpec((tile_m, f), lambda i, k: (i, 0)),
        scratch_shapes=[pltpu.VMEM((tile_m, f), jnp.float32)],
        compiler_params=pltpu.CompilerParams(
            dimension_semantics=("parallel", "arbitrary")),
    )(adj, p, b)


# ---------------------------------------------------------------------------
# Plain-JAX glue: densified row-normalized adjacency with self-loops,
# matching the torch.sparse construction in the reference module.
# ---------------------------------------------------------------------------
def build_norm_adj(edge_index, edge_weight, num_nodes):
    src = edge_index[0]
    dst = edge_index[1]
    loops = jnp.arange(num_nodes, dtype=edge_index.dtype)

    # Self-loop weight = mean(edge_weight); when the caller had no weights the
    # wrapper passes ones, whose mean is 1 — identical to the torch branch.
    self_weight = jnp.ones((num_nodes,), jnp.float32) * edge_weight.mean()

    src = jnp.concatenate([src, loops])
    dst = jnp.concatenate([dst, loops])
    w = jnp.concatenate([edge_weight.astype(jnp.float32), self_weight])

    # COO coalescing == scatter-add of duplicate entries. Row i aggregates
    # over dst of edges whose src is i, same as the torch.sparse.mm direction.
    adj = jnp.zeros((num_nodes, num_nodes), jnp.float32).at[src, dst].add(w)
    degree = jnp.clip(adj.sum(axis=1), 1.0, None)
    return adj * (1.0 / degree)[:, None]


class GraphSAGEParams:
    """Deterministic parameter init matching nn.Linear shapes."""

    def __init__(self, key, dim_in, dim_h, dim_out):
        k1, k2, k3, k4 = jax.random.split(key, 4)
        # nn.Linear stores weight as [out, in]; keep the transposed [in, out]
        # copy so kernels do h @ W + b directly on the MXU.
        bound1 = 1.0 / (dim_in ** 0.5)
        bound2 = 1.0 / (dim_h ** 0.5)
        self.w1t = jax.random.uniform(k1, (dim_in, dim_h), jnp.float32, -bound1, bound1)
        self.b1 = jax.random.uniform(k2, (1, dim_h), jnp.float32, -bound1, bound1)
        self.w2t = jax.random.uniform(k3, (dim_h, dim_out), jnp.float32, -bound2, bound2)
        self.b2 = jax.random.uniform(k4, (1, dim_out), jnp.float32, -bound2, bound2)


@jax.jit
def _forward(w1t, b1, w2t, b2, x, edge_index, edge_weight):
    n, dim_in = x.shape
    dim_h = w1t.shape[1]
    dim_out = w2t.shape[1]

    tile = _pick_tile(n)
    n_pad = _round_up(n, tile)
    f_in = _round_up(dim_in, _LANE)
    f_h = _round_up(dim_h, _LANE)
    f_out = _round_up(dim_out, _LANE)

    # TODO(synk): for genuinely sparse / large graphs replace this dense [N,N]
    # adjacency with a CSR gather (PrefetchScalarGridSpec + row-ptr/col-idx).
    norm_adj = build_norm_adj(edge_index, edge_weight, n)
    adj_pad = jnp.zeros((n_pad, n_pad), jnp.bfloat16)
    adj_pad = adj_pad.at[:n, :n].set(norm_adj.astype(jnp.bfloat16))

    x_pad = jnp.zeros((n_pad, f_in), jnp.float32).at[:n, :dim_in].set(x)

    w1 = jnp.zeros((f_in, f_h), jnp.float32).at[:dim_in, :dim_h].set(w1t)
    b1p = jnp.zeros((1, f_h), jnp.float32).at[:, :dim_h].set(b1)
    w2 = jnp.zeros((f_h, f_out), jnp.float32).at[:dim_h, :dim_out].set(w2t)
    b2p = jnp.zeros((1, f_out), jnp.float32).at[:, :dim_out].set(b2)

    # ---- Layer 1: relu((adj @ x) @ W1 + b1) --------------------------------
    # Pick the cheaper (mathematically exact) associativity order from the
    # padded feature widths.
    if f_in <= f_h:
        ax = propagate(adj_pad, x_pad.astype(jnp.bfloat16),
                       jnp.zeros((1, f_in), jnp.float32),
                       relu=False, log_softmax_cols=None,
                       tile_m=tile, tile_k=tile)
        h1 = transform(ax, w1, b1p, relu=True, tile_m=tile)
    else:
        xw = transform(x_pad, w1, jnp.zeros((1, f_h), jnp.float32),
                       relu=False, tile_m=tile)
        h1 = propagate(adj_pad, xw.astype(jnp.bfloat16), b1p,
                       relu=True, log_softmax_cols=None,
                       tile_m=tile, tile_k=tile)

    # TODO(synk): F.dropout(p=0.2) is identity in eval mode; training-mode
    # stochastic dropout (pltpu.prng_random_bits mask) intentionally omitted.

    # ---- Layer 2: log_softmax(adj @ (h1 @ W2) + b2) ------------------------
    # Associativity reorder: the N^2 propagation now runs over dim_out columns
    # instead of dim_h (typically dim_out << dim_h for classification).
    p2 = transform(h1, w2, jnp.zeros((1, f_out), jnp.float32),
                   relu=False, tile_m=tile)
    out = propagate(adj_pad, p2.astype(jnp.bfloat16), b2p,
                    relu=False, log_softmax_cols=dim_out,
                    tile_m=tile, tile_k=tile)
    return out[:n, :dim_out]


def graphsage_forward(params, x, edge_index, edge_weight=None):
    if edge_weight is None:
        edge_weight = jnp.ones((edge_index.shape[1],), jnp.float32)
    return _forward(params.w1t, params.b1, params.w2t, params.b2,
                    x, edge_index, edge_weight)


if __name__ == "__main__":
    key = jax.random.PRNGKey(0)
    k_x, k_e, k_p = jax.random.split(key, 3)

    num_nodes, dim_in, dim_h, dim_out = 16, 8, 32, 4
    num_edges = 24

    x = jax.random.normal(k_x, (num_nodes, dim_in), dtype=jnp.float32)
    edge_index = jax.random.randint(k_e, (2, num_edges), 0, num_nodes, dtype=jnp.int32)

    params = GraphSAGEParams(k_p, dim_in, dim_h, dim_out)

    out = graphsage_forward(params, x, edge_index, edge_weight=None)
    out = jax.block_until_ready(out)

    assert out.shape == (num_nodes, dim_out)
    # log_softmax rows should sum to ~1 after exp
    row_sums = jnp.exp(out).sum(axis=-1)
    assert bool(jnp.allclose(row_sums, 1.0, atol=1e-4))
    assert bool(jnp.all(jnp.isfinite(out)))

    print("KERNEL_OK")
</pallas_src>

<mosaic_0001>
module attributes {stable_mosaic.version = 11 : i64} {
  func.func private @main(%arg0: i32) attributes {dimension_semantics = [#tpu.dimension_semantics<core_parallel>], iteration_bounds = array<i64: 2>, tpu.core_type = #tpu.core_type<sc_scalar_subcore>, window_params = []} {
    return
  }
}

module attributes {stable_mosaic.version = 11 : i64} {
  func.func private @main(%arg0: i32) attributes {dimension_semantics = [#tpu.dimension_semantics<core_parallel>], iteration_bounds = array<i64: 2>, tpu.core_type = #tpu.core_type<sc_scalar_subcore>, window_params = []} {
    return
  }
}

module attributes {stable_mosaic.version = 11 : i64} {
  func.func @_transform_kernel(%arg0: i32, %arg1: memref<128x128xf32, #tpu.memory_space<vmem>>, %arg2: memref<128x128xf32, #tpu.memory_space<vmem>>, %arg3: memref<1x128xf32, #tpu.memory_space<vmem>>, %arg4: memref<128x128xf32, #tpu.memory_space<vmem>>) attributes {dimension_semantics = [#tpu.dimension_semantics<parallel>], iteration_bounds = array<i64: 1>, scalar_prefetch = 0 : i64, scratch_operands = 0 : i64, tpu.core_type = #tpu.core_type<tc>, window_params = [{transform_indices = @transform_0, window_bounds = array<i64: 128, 128>}, {pipeline_mode = #tpu.pipeline_mode<synchronous>, transform_indices = @transform_1, window_bounds = array<i64: 128, 128>}, {pipeline_mode = #tpu.pipeline_mode<synchronous>, transform_indices = @transform_2, window_bounds = array<i64: 1, 128>}, {transform_indices = @transform_3, window_bounds = array<i64: 128, 128>}]} {
    %c0 = arith.constant 0 : index
    %c0_0 = arith.constant 0 : index
    %0 = vector.load %arg1[%c0, %c0_0] : memref<128x128xf32, #tpu.memory_space<vmem>>, vector<128x128xf32>
    %c0_1 = arith.constant 0 : index
    %c0_2 = arith.constant 0 : index
    %1 = vector.load %arg2[%c0_1, %c0_2] : memref<128x128xf32, #tpu.memory_space<vmem>>, vector<128x128xf32>
    %cst = arith.constant dense<0.000000e+00> : vector<128x128xf32>
    %2 = tpu.matmul %0, %1, %cst {dimension_numbers = #tpu.dot_dimension_numbers<[1], [0], [0], [1], [0, 0, 1, 1], [], []>} : vector<128x128xf32>, vector<128x128xf32>, vector<128x128xf32> -> vector<128x128xf32>
    %c0_3 = arith.constant 0 : index
    %c0_4 = arith.constant 0 : index
    %3 = vector.load %arg3[%c0_3, %c0_4] : memref<1x128xf32, #tpu.memory_space<vmem>>, vector<1x128xf32>
    %4 = vector.broadcast %3 : vector<1x128xf32> to vector<128x128xf32>
    %5 = arith.addf %2, %4 : vector<128x128xf32>
    %cst_5 = arith.constant 0.000000e+00 : f32
    %6 = vector.broadcast %cst_5 : f32 to vector<128x128xf32>
    %7 = arith.maximumf %5, %6 : vector<128x128xf32>
    %c0_6 = arith.constant 0 : index
    %c0_7 = arith.constant 0 : index
    %8 = vector.load %arg4[%c0_6, %c0_7] : memref<128x128xf32, #tpu.memory_space<vmem>>, vector<128x128xf32>
    tpu.vector_store %arg4[%c0_6, %c0_7], %7 {strides = array<i32>} : memref<128x128xf32, #tpu.memory_space<vmem>>, vector<128x128xf32>,
    return
  }
  func.func @transform_0(%arg0: i32) -> (i32, i32) {
    %c0_i32 = arith.constant 0 : i32
    %c0_i32_0 = arith.constant 0 : i32
    return %arg0, %c0_i32 : i32, i32
  }
  func.func @transform_1(%arg0: i32) -> (i32, i32) {
    %c0_i32 = arith.constant 0 : i32
    %c0_i32_0 = arith.constant 0 : i32
    %c0_i32_1 = arith.constant 0 : i32
    return %c0_i32, %c0_i32_0 : i32, i32
  }
  func.func @transform_2(%arg0: i32) -> (i32, i32) {
    %c0_i32 = arith.constant 0 : i32
    %c0_i32_0 = arith.constant 0 : i32
    %c0_i32_1 = arith.constant 0 : i32
    return %c0_i32, %c0_i32_0 : i32, i32
  }
  func.func @transform_3(%arg0: i32) -> (i32, i32) {
    %c0_i32 = arith.constant 0 : i32
    %c0_i32_0 = arith.constant 0 : i32
    return %arg0, %c0_i32 : i32, i32
  }
}

module attributes {stable_mosaic.version = 11 : i64} {
  func.func @_propagate_kernel(%arg0: i32, %arg1: i32, %arg2: memref<128x128xbf16, #tpu.memory_space<vmem>>, %arg3: memref<128x128xbf16, #tpu.memory_space<vmem>>, %arg4: memref<1x128xf32, #tpu.memory_space<vmem>>, %arg5: memref<128x128xf32, #tpu.memory_space<vmem>>, %arg6: memref<128x128xf32, #tpu.memory_space<vmem>>) attributes {dimension_semantics = [#tpu.dimension_semantics<parallel>, #tpu.dimension_semantics<arbitrary>], iteration_bounds = array<i64: 1, 1>, scalar_prefetch = 0 : i64, scratch_operands = 1 : i64, tpu.core_type = #tpu.core_type<tc>, window_params = [{transform_indices = @transform_0, window_bounds = array<i64: 128, 128>}, {transform_indices = @transform_1, window_bounds = array<i64: 128, 128>}, {pipeline_mode = #tpu.pipeline_mode<synchronous>, transform_indices = @transform_2, window_bounds = array<i64: 1, 128>}, {transform_indices = @transform_3, window_bounds = array<i64: 128, 128>}]} {
    %c0_i32 = arith.constant 0 : i32
    %0 = arith.cmpi eq, %arg1, %c0_i32 : i32
    %1 = arith.extui %0 : i1 to i32
    %c0_i32_0 = arith.constant 0 : i32
    %2 = arith.cmpi ne, %1, %c0_i32_0 : i32
    scf.if %2 {
      %cst_10 = arith.constant 0.000000e+00 : f32
      %12 = vector.broadcast %cst_10 : f32 to vector<128x128xf32>
      %c0_11 = arith.constant 0 : index
      %c0_12 = arith.constant 0 : index
      %13 = vector.load %arg6[%c0_11, %c0_12] : memref<128x128xf32, #tpu.memory_space<vmem>>, vector<128x128xf32>
      tpu.vector_store %arg6[%c0_11, %c0_12], %12 {strides = array<i32>} : memref<128x128xf32, #tpu.memory_space<vmem>>, vector<128x128xf32>,
    } else {
    }
    %c0 = arith.constant 0 : index
    %c0_1 = arith.constant 0 : index
    %3 = vector.load %arg6[%c0, %c0_1] : memref<128x128xf32, #tpu.memory_space<vmem>>, vector<128x128xf32>
    %c0_2 = arith.constant 0 : index
    %c0_3 = arith.constant 0 : index
    %4 = vector.load %arg2[%c0_2, %c0_3] : memref<128x128xbf16, #tpu.memory_space<vmem>>, vector<128x128xbf16>
    %c0_4 = arith.constant 0 : index
    %c0_5 = arith.constant 0 : index
    %5 = vector.load %arg3[%c0_4, %c0_5] : memref<128x128xbf16, #tpu.memory_space<vmem>>, vector<128x128xbf16>
    %cst = arith.constant dense<0.000000e+00> : vector<128x128xf32>
    %6 = tpu.matmul %4, %5, %cst {dimension_numbers = #tpu.dot_dimension_numbers<[1], [0], [0], [1], [0, 0, 1, 1], [], []>} : vector<128x128xbf16>, vector<128x128xbf16>, vector<128x128xf32> -> vector<128x128xf32>
    %7 = arith.addf %3, %6 : vector<128x128xf32>
    %c0_6 = arith.constant 0 : index
    %c0_7 = arith.constant 0 : index
    %8 = vector.load %arg6[%c0_6, %c0_7] : memref<128x128xf32, #tpu.memory_space<vmem>>, vector<128x128xf32>
    tpu.vector_store %arg6[%c0_6, %c0_7], %7 {strides = array<i32>} : memref<128x128xf32, #tpu.memory_space<vmem>>, vector<128x128xf32>,
    %c0_i32_8 = arith.constant 0 : i32
    %9 = arith.cmpi eq, %arg1, %c0_i32_8 : i32
    %10 = arith.extui %9 : i1 to i32
    %c0_i32_9 = arith.constant 0 : i32
    %11 = arith.cmpi ne, %10, %c0_i32_9 : i32
    scf.if %11 {
      %c0_10 = arith.constant 0 : index
      %c0_11 = arith.constant 0 : index
      %12 = vector.load %arg6[%c0_10, %c0_11] : memref<128x128xf32, #tpu.memory_space<vmem>>, vector<128x128xf32>
      %c0_12 = arith.constant 0 : index
      %c0_13 = arith.constant 0 : index
      %13 = vector.load %arg4[%c0_12, %c0_13] : memref<1x128xf32, #tpu.memory_space<vmem>>, vector<1x128xf32>
      %14 = vector.broadcast %13 : vector<1x128xf32> to vector<128x128xf32>
      %15 = arith.addf %12, %14 : vector<128x128xf32>
      %c0_14 = arith.constant 0 : index
      %c0_15 = arith.constant 0 : index
      %16 = vector.load %arg5[%c0_14, %c0_15] : memref<128x128xf32, #tpu.memory_space<vmem>>, vector<128x128xf32>
      tpu.vector_store %arg5[%c0_14, %c0_15], %15 {strides = array<i32>} : memref<128x128xf32, #tpu.memory_space<vmem>>, vector<128x128xf32>,
    } else {
    }
    return
  }
  func.func @transform_0(%arg0: i32, %arg1: i32) -> (i32, i32) {
    %c0_i32 = arith.constant 0 : i32
    return %arg0, %arg1 : i32, i32
  }
  func.func @transform_1(%arg0: i32, %arg1: i32) -> (i32, i32) {
    %c0_i32 = arith.constant 0 : i32
    %c0_i32_0 = arith.constant 0 : i32
    return %arg1, %c0_i32 : i32, i32
  }
  func.func @transform_2(%arg0: i32, %arg1: i32) -> (i32, i32) {
    %c0_i32 = arith.constant 0 : i32
    %c0_i32_0 = arith.constant 0 : i32
    %c0_i32_1 = arith.constant 0 : i32
    return %c0_i32, %c0_i32_0 : i32, i32
  }
  func.func @transform_3(%arg0: i32, %arg1: i32) -> (i32, i32) {
    %c0_i32 = arith.constant 0 : i32
    %c0_i32_0 = arith.constant 0 : i32
    return %arg0, %c0_i32 : i32, i32
  }
}

module attributes {stable_mosaic.version = 11 : i64} {
  func.func @_transform_kernel(%arg0: i32, %arg1: memref<128x128xf32, #tpu.memory_space<vmem>>, %arg2: memref<128x128xf32, #tpu.memory_space<vmem>>, %arg3: memref<1x128xf32, #tpu.memory_space<vmem>>, %arg4: memref<128x128xf32, #tpu.memory_space<vmem>>) attributes {dimension_semantics = [#tpu.dimension_semantics<parallel>], iteration_bounds = array<i64: 1>, scalar_prefetch = 0 : i64, scratch_operands = 0 : i64, tpu.core_type = #tpu.core_type<tc>, window_params = [{transform_indices = @transform_0, window_bounds = array<i64: 128, 128>}, {pipeline_mode = #tpu.pipeline_mode<synchronous>, transform_indices = @transform_1, window_bounds = array<i64: 128, 128>}, {pipeline_mode = #tpu.pipeline_mode<synchronous>, transform_indices = @transform_2, window_bounds = array<i64: 1, 128>}, {transform_indices = @transform_3, window_bounds = array<i64: 128, 128>}]} {
    %c0 = arith.constant 0 : index
    %c0_0 = arith.constant 0 : index
    %0 = vector.load %arg1[%c0, %c0_0] : memref<128x128xf32, #tpu.memory_space<vmem>>, vector<128x128xf32>
    %c0_1 = arith.constant 0 : index
    %c0_2 = arith.constant 0 : index
    %1 = vector.load %arg2[%c0_1, %c0_2] : memref<128x128xf32, #tpu.memory_space<vmem>>, vector<128x128xf32>
    %cst = arith.constant dense<0.000000e+00> : vector<128x128xf32>
    %2 = tpu.matmul %0, %1, %cst {dimension_numbers = #tpu.dot_dimension_numbers<[1], [0], [0], [1], [0, 0, 1, 1], [], []>} : vector<128x128xf32>, vector<128x128xf32>, vector<128x128xf32> -> vector<128x128xf32>
    %c0_3 = arith.constant 0 : index
    %c0_4 = arith.constant 0 : index
    %3 = vector.load %arg3[%c0_3, %c0_4] : memref<1x128xf32, #tpu.memory_space<vmem>>, vector<1x128xf32>
    %4 = vector.broadcast %3 : vector<1x128xf32> to vector<128x128xf32>
    %5 = arith.addf %2, %4 : vector<128x128xf32>
    %c0_5 = arith.constant 0 : index
    %c0_6 = arith.constant 0 : index
    %6 = vector.load %arg4[%c0_5, %c0_6] : memref<128x128xf32, #tpu.memory_space<vmem>>, vector<128x128xf32>
    tpu.vector_store %arg4[%c0_5, %c0_6], %5 {strides = array<i32>} : memref<128x128xf32, #tpu.memory_space<vmem>>, vector<128x128xf32>,
    return
  }
  func.func @transform_0(%arg0: i32) -> (i32, i32) {
    %c0_i32 = arith.constant 0 : i32
    %c0_i32_0 = arith.constant 0 : i32
    return %arg0, %c0_i32 : i32, i32
  }
  func.func @transform_1(%arg0: i32) -> (i32, i32) {
    %c0_i32 = arith.constant 0 : i32
    %c0_i32_0 = arith.constant 0 : i32
    %c0_i32_1 = arith.constant 0 : i32
    return %c0_i32, %c0_i32_0 : i32, i32
  }
  func.func @transform_2(%arg0: i32) -> (i32, i32) {
    %c0_i32 = arith.constant 0 : i32
    %c0_i32_0 = arith.constant 0 : i32
    %c0_i32_1 = arith.constant 0 : i32
    return %c0_i32, %c0_i32_0 : i32, i32
  }
  func.func @transform_3(%arg0: i32) -> (i32, i32) {
    %c0_i32 = arith.constant 0 : i32
    %c0_i32_0 = arith.constant 0 : i32
    return %arg0, %c0_i32 : i32, i32
  }
}

module attributes {stable_mosaic.version = 11 : i64} {
  func.func @_propagate_kernel(%arg0: i32, %arg1: i32, %arg2: memref<128x128xbf16, #tpu.memory_space<vmem>>, %arg3: memref<128x128xbf16, #tpu.memory_space<vmem>>, %arg4: memref<1x128xf32, #tpu.memory_space<vmem>>, %arg5: memref<128x128xf32, #tpu.memory_space<vmem>>, %arg6: memref<128x128xf32, #tpu.memory_space<vmem>>) attributes {dimension_semantics = [#tpu.dimension_semantics<parallel>, #tpu.dimension_semantics<arbitrary>], iteration_bounds = array<i64: 1, 1>, scalar_prefetch = 0 : i64, scratch_operands = 1 : i64, tpu.core_type = #tpu.core_type<tc>, window_params = [{transform_indices = @transform_0, window_bounds = array<i64: 128, 128>}, {transform_indices = @transform_1, window_bounds = array<i64: 128, 128>}, {pipeline_mode = #tpu.pipeline_mode<synchronous>, transform_indices = @transform_2, window_bounds = array<i64: 1, 128>}, {transform_indices = @transform_3, window_bounds = array<i64: 128, 128>}]} {
    %c0_i32 = arith.constant 0 : i32
    %0 = arith.cmpi eq, %arg1, %c0_i32 : i32
    %1 = arith.extui %0 : i1 to i32
    %c0_i32_0 = arith.constant 0 : i32
    %2 = arith.cmpi ne, %1, %c0_i32_0 : i32
    scf.if %2 {
      %cst_10 = arith.constant 0.000000e+00 : f32
      %12 = vector.broadcast %cst_10 : f32 to vector<128x128xf32>
      %c0_11 = arith.constant 0 : index
      %c0_12 = arith.constant 0 : index
      %13 = vector.load %arg6[%c0_11, %c0_12] : memref<128x128xf32, #tpu.memory_space<vmem>>, vector<128x128xf32>
      tpu.vector_store %arg6[%c0_11, %c0_12], %12 {strides = array<i32>} : memref<128x128xf32, #tpu.memory_space<vmem>>, vector<128x128xf32>,
    } else {
    }
    %c0 = arith.constant 0 : index
    %c0_1 = arith.constant 0 : index
    %3 = vector.load %arg6[%c0, %c0_1] : memref<128x128xf32, #tpu.memory_space<vmem>>, vector<128x128xf32>
    %c0_2 = arith.constant 0 : index
    %c0_3 = arith.constant 0 : index
    %4 = vector.load %arg2[%c0_2, %c0_3] : memref<128x128xbf16, #tpu.memory_space<vmem>>, vector<128x128xbf16>
    %c0_4 = arith.constant 0 : index
    %c0_5 = arith.constant 0 : index
    %5 = vector.load %arg3[%c0_4, %c0_5] : memref<128x128xbf16, #tpu.memory_space<vmem>>, vector<128x128xbf16>
    %cst = arith.constant dense<0.000000e+00> : vector<128x128xf32>
    %6 = tpu.matmul %4, %5, %cst {dimension_numbers = #tpu.dot_dimension_numbers<[1], [0], [0], [1], [0, 0, 1, 1], [], []>} : vector<128x128xbf16>, vector<128x128xbf16>, vector<128x128xf32> -> vector<128x128xf32>
    %7 = arith.addf %3, %6 : vector<128x128xf32>
    %c0_6 = arith.constant 0 : index
    %c0_7 = arith.constant 0 : index
    %8 = vector.load %arg6[%c0_6, %c0_7] : memref<128x128xf32, #tpu.memory_space<vmem>>, vector<128x128xf32>
    tpu.vector_store %arg6[%c0_6, %c0_7], %7 {strides = array<i32>} : memref<128x128xf32, #tpu.memory_space<vmem>>, vector<128x128xf32>,
    %c0_i32_8 = arith.constant 0 : i32
    %9 = arith.cmpi eq, %arg1, %c0_i32_8 : i32
    %10 = arith.extui %9 : i1 to i32
    %c0_i32_9 = arith.constant 0 : i32
    %11 = arith.cmpi ne, %10, %c0_i32_9 : i32
    scf.if %11 {
      %c0_10 = arith.constant 0 : index
      %c0_11 = arith.constant 0 : index
      %12 = vector.load %arg6[%c0_10, %c0_11] : memref<128x128xf32, #tpu.memory_space<vmem>>, vector<128x128xf32>
      %c0_12 = arith.constant 0 : index
      %c0_13 = arith.constant 0 : index
      %13 = vector.load %arg4[%c0_12, %c0_13] : memref<1x128xf32, #tpu.memory_space<vmem>>, vector<1x128xf32>
      %14 = vector.broadcast %13 : vector<1x128xf32> to vector<128x128xf32>
      %15 = arith.addf %12, %14 : vector<128x128xf32>
      %16 = tpu.iota {dimensions = array<i32: 1>} : vector<128x128xi32>
      %c4_i32 = arith.constant 4 : i32
      %17 = vector.broadcast %c4_i32 : i32 to vector<128x128xi32>
      %18 = arith.cmpi slt, %16, %17 : vector<128x128xi32>
      %cst_14 = arith.constant -1.000000e+30 : f32
      %19 = vector.broadcast %cst_14 : f32 to vector<128x128xf32>
      %20 = arith.select %18, %15, %19 : vector<128x128xi1>, vector<128x128xf32>
      %cst_15 = arith.constant dense<0xFF800000> : vector<128xf32>
      %21 = vector.multi_reduction <maximumf>, %20, %cst_15 [1] : vector<128x128xf32> to vector<128xf32>
      %22 = vector.shape_cast %21 : vector<128xf32> to vector<128x1xf32>
      %23 = vector.broadcast %22 : vector<128x1xf32> to vector<128x128xf32>
      %24 = arith.subf %20, %23 : vector<128x128xf32>
      %25 = math.exp %24 : vector<128x128xf32>
      %cst_16 = arith.constant dense<0.000000e+00> : vector<128xf32>
      %26 = vector.multi_reduction <add>, %25, %cst_16 [1] : vector<128x128xf32> to vector<128xf32>
      %27 = vector.shape_cast %26 : vector<128xf32> to vector<128x1xf32>
      %28 = math.log %27 : vector<128x1xf32>
      %29 = vector.broadcast %28 : vector<128x1xf32> to vector<128x128xf32>
      %30 = arith.subf %24, %29 : vector<128x128xf32>
      %c0_17 = arith.constant 0 : index
      %c0_18 = arith.constant 0 : index
      %31 = vector.load %arg5[%c0_17, %c0_18] : memref<128x128xf32, #tpu.memory_space<vmem>>, vector<128x128xf32>
      tpu.vector_store %arg5[%c0_17, %c0_18], %30 {strides = array<i32>} : memref<128x128xf32, #tpu.memory_space<vmem>>, vector<128x128xf32>,
    } else {
    }
    return
  }
  func.func @transform_0(%arg0: i32, %arg1: i32) -> (i32, i32) {
    %c0_i32 = arith.constant 0 : i32
    return %arg0, %arg1 : i32, i32
  }
  func.func @transform_1(%arg0: i32, %arg1: i32) -> (i32, i32) {
    %c0_i32 = arith.constant 0 : i32
    %c0_i32_0 = arith.constant 0 : i32
    return %arg1, %c0_i32 : i32, i32
  }
  func.func @transform_2(%arg0: i32, %arg1: i32) -> (i32, i32) {
    %c0_i32 = arith.constant 0 : i32
    %c0_i32_0 = arith.constant 0 : i32
    %c0_i32_1 = arith.constant 0 : i32
    return %c0_i32, %c0_i32_0 : i32, i32
  }
  func.func @transform_3(%arg0: i32, %arg1: i32) -> (i32, i32) {
    %c0_i32 = arith.constant 0 : i32
    %c0_i32_0 = arith.constant 0 : i32
    return %arg0, %c0_i32 : i32, i32
  }
}

</mosaic_0001>

<llo_original>
// kernel: _forward.6
$region0: #{_forward.6}
  #allocation0 [shape = 'u32[]', space=smem, size = 0x4, offset = 0x4, fixed_abs, tag = 'smem constant byte address 0x4 - core index']
  #allocation1 [shape = 'u32[144,128]{1,0:T(1,128)}', space=vmem, size = 0x12000, scoped, tag = 'internal scratch']
  %s0 = inlined_call_operand.vmem [shape: f32[128,128], index: 0, kind: input, shape index: {}]
  %s1 = inlined_call_operand.vmem [shape: f32[128,128], index: 1, kind: input, shape index: {}]
  %s2 = inlined_call_operand.vmem [shape: f32[1,128], index: 2, kind: input, shape index: {}]
  %s3 = inlined_call_operand.vmem [shape: f32[128,128], index: 3, kind: output, shape index: {}]
  %s4 = sld [smem:[#allocation0]]
  $region22: #{_forward.6} parent=0
    _
  %s6 = ssub.s32 1, %s4
  %s7 = scalar_select 0, %s6, %s4
  // Predicated region
  $region2: #{_forward.6} parent=0 // pred_check
    _
  $region3: #{_forward.6} parent=0 // pred_check_branch
    %9 = sbr.rel (0) target = $region5
  $region4: #{_forward.6} parent=0 // pred_region
    _
  $region5: #{_forward.6} parent=0 // pred_fallthru
    _
  // Predicated region
  $region6: #{_forward.6} parent=0 // pred_check
    _
  $region7: #{_forward.6} parent=0 // pred_check_branch
    %11 = sbr.rel (0) target = $region9
  $region8: #{_forward.6} parent=0 // pred_region
    _
  $region9: #{_forward.6} parent=0 // pred_fallthru
    _
  // Predicated region
  $region10: #{_forward.6} parent=0 // pred_check
    _
  $region11: #{_forward.6} parent=0 // pred_check_branch
    %13 = sbr.rel (0) target = $region13
  $region12: #{_forward.6} parent=0 // pred_region
    _
  $region13: #{_forward.6} parent=0 // pred_fallthru
    _
  %v14 = vld [vmem:[%s0] sm:$0xff]
  %v15 = vld [vmem:[%s0 + $0x8] sm:$0xff]
  %v16 = vld [vmem:[%s0 + $0x10] sm:$0xff]
  %v17 = vld [vmem:[%s0 + $0x18] sm:$0xff]
  %v18 = vld [vmem:[%s0 + $0x20] sm:$0xff]
  %v19 = vld [vmem:[%s0 + $0x28] sm:$0xff]
  %v20 = vld [vmem:[%s0 + $0x30] sm:$0xff]
  %v21 = vld [vmem:[%s0 + $0x38] sm:$0xff]
  %v22 = vld [vmem:[%s0 + $0x40] sm:$0xff]
  %v23 = vld [vmem:[%s0 + $0x48] sm:$0xff]
  %v24 = vld [vmem:[%s0 + $0x50] sm:$0xff]
  %v25 = vld [vmem:[%s0 + $0x58] sm:$0xff]
  %v26 = vld [vmem:[%s0 + $0x60] sm:$0xff]
  %v27 = vld [vmem:[%s0 + $0x68] sm:$0xff]
  %v28 = vld [vmem:[%s0 + $0x70] sm:$0xff]
  %v29 = vld [vmem:[%s0 + $0x78] sm:$0xff]
  %v30 = vld [vmem:[%s1] sm:$0xff]
  %v31 = vld [vmem:[%s1 + $0x8] sm:$0xff]
  %v32 = vld [vmem:[%s1 + $0x10] sm:$0xff]
  %v33 = vld [vmem:[%s1 + $0x18] sm:$0xff]
  %v34 = vld [vmem:[%s1 + $0x20] sm:$0xff]
  %v35 = vld [vmem:[%s1 + $0x28] sm:$0xff]
  %v36 = vld [vmem:[%s1 + $0x30] sm:$0xff]
  %v37 = vld [vmem:[%s1 + $0x38] sm:$0xff]
  %v38 = vld [vmem:[%s1 + $0x40] sm:$0xff]
  %v39 = vld [vmem:[%s1 + $0x48] sm:$0xff]
  %v40 = vld [vmem:[%s1 + $0x50] sm:$0xff]
  %v41 = vld [vmem:[%s1 + $0x58] sm:$0xff]
  %v42 = vld [vmem:[%s1 + $0x60] sm:$0xff]
  %v43 = vld [vmem:[%s1 + $0x68] sm:$0xff]
  %v44 = vld [vmem:[%s1 + $0x70] sm:$0xff]
  %v45 = vld [vmem:[%s1 + $0x78] sm:$0xff]
  %v46 = vld [vmem:[%s2] sm:$0x1]
  %v48 = vlaneseq
  %v49 = vshrl.u32 %v48, 7
  %v50 = vsub.s32 0, %v49
  %v51 = vrot.slane %v46, %v50
  %53 = vmatprep.subr.mxu0 0.0
  %54 = vmatpush1.msra.mxu0 %v45
  %55 = vmatprep.subr.mxu0 0.0
  %56 = vmatpush1.msra.mxu0 %v44
  %57 = vmatprep.subr.mxu0 0.0
  %58 = vmatpush1.msra.mxu0 %v43
  %59 = vmatprep.subr.mxu0 0.0
  %60 = vmatpush1.msra.mxu0 %v42
  %61 = vmatprep.subr.mxu0 0.0
  %62 = vmatpush1.msra.mxu0 %v41
  %63 = vmatprep.subr.mxu0 0.0
  %64 = vmatpush1.msra.mxu0 %v40
  %65 = vmatprep.subr.mxu0 0.0
  %66 = vmatpush1.msra.mxu0 %v39
  %67 = vmatprep.subr.mxu0 0.0
  %68 = vmatpush1.msra.mxu0 %v38
  %69 = vmatprep.subr.mxu0 0.0
  %70 = vmatpush1.msra.mxu0 %v37
  %71 = vmatprep.subr.mxu0 0.0
  %72 = vmatpush1.msra.mxu0 %v36
  %73 = vmatprep.subr.mxu0 0.0
  %74 = vmatpush1.msra.mxu0 %v35
  %75 = vmatprep.subr.mxu0 0.0
  %76 = vmatpush1.msra.mxu0 %v34
  %77 = vmatprep.subr.mxu0 0.0
  %78 = vmatpush1.msra.mxu0 %v33
  %79 = vmatprep.subr.mxu0 0.0
  %80 = vmatpush1.msra.mxu0 %v32
  %81 = vmatprep.subr.mxu0 0.0
  %82 = vmatpush1.msra.mxu0 %v31
  %83 = vmatprep.subr.mxu0 0.0
  %84 = vmatpush1.msra.mxu0 %v30
  %85 = vmatprep.subr.mxu0 0.0
  %86 = vmatpush2.msra.mxu0 0.0
  %87 = vmatprep.subr.mxu0 0.0
  %88 = vmatpush2.msra.mxu0 0.0
  %89 = vmatprep.subr.mxu0 0.0
  %90 = vmatpush2.msra.mxu0 0.0
  %91 = vmatprep.subr.mxu0 0.0
  %92 = vmatpush2.msra.mxu0 0.0
  %93 = vmatprep.subr.mxu0 0.0
  %94 = vmatpush2.msra.mxu0 0.0
  %95 = vmatprep.subr.mxu0 0.0
  %96 = vmatpush2.msra.mxu0 0.0
  %97 = vmatprep.subr.mxu0 0.0
  %98 = vmatpush2.msra.mxu0 0.0
  %99 = vmatprep.subr.mxu0 0.0
  %100 = vmatpush2.msra.mxu0 0.0
  %101 = vmatprep.subr.mxu0 0.0
  %102 = vmatpush2.msra.mxu0 0.0
  %103 = vmatprep.subr.mxu0 0.0
  %104 = vmatpush2.msra.mxu0 0.0
  %105 = vmatprep.subr.mxu0 0.0
  %106 = vmatpush2.msra.mxu0 0.0
  %107 = vmatprep.subr.mxu0 0.0
  %108 = vmatpush2.msra.mxu0 0.0
  %109 = vmatprep.subr.mxu0 0.0
  %110 = vmatpush2.msra.mxu0 0.0
  %111 = vmatprep.subr.mxu0 0.0
  %112 = vmatpush2.msra.mxu0 0.0
  %113 = vmatprep.subr.mxu0 0.0
  %114 = vmatpush2.msra.mxu0 0.0
  %115 = vmatprep.subr.mxu0 0.0
  %116 = vmatpush2.msra.mxu0 0.0
  %117 = vmatprep.mubr.f32.mxu0 0.0
  %118 = vmatmul.mubr.f32.gmra.mxu0 %v14
  %v119 = vpop.f32.mrf.mxu0
  %v120 = vadd.f32 %v51, %v119
  %v121 = vpop.f32.mrf.mxu0
  %122 = vmatprep.mubr.f32.mxu0 0.0
  %123 = vmatmul.mubr.f32.gmra.mxu0 %v15
  %v124 = vpop.f32.mrf.mxu0
  %v125 = vadd.f32 %v51, %v124
  %v126 = vpop.f32.mrf.mxu0
  %127 = vmatprep.mubr.f32.mxu0 0.0
  %128 = vmatmul.mubr.f32.gmra.mxu0 %v16
  %v129 = vpop.f32.mrf.mxu0
  %v130 = vadd.f32 %v51, %v129
  %v131 = vpop.f32.mrf.mxu0
  %132 = vmatprep.mubr.f32.mxu0 0.0
  %133 = vmatmul.mubr.f32.gmra.mxu0 %v17
  %v134 = vpop.f32.mrf.mxu0
  %v135 = vadd.f32 %v51, %v134
  %v136 = vpop.f32.mrf.mxu0
  %137 = vmatprep.mubr.f32.mxu0 0.0
  %138 = vmatmul.mubr.f32.gmra.mxu0 %v18
  %v139 = vpop.f32.mrf.mxu0
  %v140 = vadd.f32 %v51, %v139
  %v141 = vpop.f32.mrf.mxu0
  %142 = vmatprep.mubr.f32.mxu0 0.0
  %143 = vmatmul.mubr.f32.gmra.mxu0 %v19
  %v144 = vpop.f32.mrf.mxu0
  %v145 = vadd.f32 %v51, %v144
  %v146 = vpop.f32.mrf.mxu0
  %147 = vmatprep.mubr.f32.mxu0 0.0
  %148 = vmatmul.mubr.f32.gmra.mxu0 %v20
  %v149 = vpop.f32.mrf.mxu0
  %v150 = vadd.f32 %v51, %v149
  %v151 = vpop.f32.mrf.mxu0
  %152 = vmatprep.mubr.f32.mxu0 0.0
  %153 = vmatmul.mubr.f32.gmra.mxu0 %v21
  %v154 = vpop.f32.mrf.mxu0
  %v155 = vadd.f32 %v51, %v154
  %v156 = vpop.f32.mrf.mxu0
  %157 = vmatprep.mubr.f32.mxu0 0.0
  %158 = vmatmul.mubr.f32.gmra.mxu0 %v22
  %v159 = vpop.f32.mrf.mxu0
  %v160 = vadd.f32 %v51, %v159
  %v161 = vpop.f32.mrf.mxu0
  %162 = vmatprep.mubr.f32.mxu0 0.0
  %163 = vmatmul.mubr.f32.gmra.mxu0 %v23
  %v164 = vpop.f32.mrf.mxu0
  %v165 = vadd.f32 %v51, %v164
  %v166 = vpop.f32.mrf.mxu0
  %167 = vmatprep.mubr.f32.mxu0 0.0
  %168 = vmatmul.mubr.f32.gmra.mxu0 %v24
  %v169 = vpop.f32.mrf.mxu0
  %v170 = vadd.f32 %v51, %v169
  %v171 = vpop.f32.mrf.mxu0
  %172 = vmatprep.mubr.f32.mxu0 0.0
  %173 = vmatmul.mubr.f32.gmra.mxu0 %v25
  %v174 = vpop.f32.mrf.mxu0
  %v175 = vadd.f32 %v51, %v174
  %v176 = vpop.f32.mrf.mxu0
  %177 = vmatprep.mubr.f32.mxu0 0.0
  %178 = vmatmul.mubr.f32.gmra.mxu0 %v26
  %v179 = vpop.f32.mrf.mxu0
  %v180 = vadd.f32 %v51, %v179
  %v181 = vpop.f32.mrf.mxu0
  %182 = vmatprep.mubr.f32.mxu0 0.0
  %183 = vmatmul.mubr.f32.gmra.mxu0 %v27
  %v184 = vpop.f32.mrf.mxu0
  %v185 = vadd.f32 %v51, %v184
  %v186 = vpop.f32.mrf.mxu0
  %187 = vmatprep.mubr.f32.mxu0 0.0
  %188 = vmatmul.mubr.f32.gmra.mxu0 %v28
  %v189 = vpop.f32.mrf.mxu0
  %v190 = vadd.f32 %v51, %v189
  %v191 = vpop.f32.mrf.mxu0
  %192 = vmatprep.mubr.f32.mxu0 0.0
  %193 = vmatmul.mubr.f32.gmra.mxu0 %v29
  %v194 = vpop.f32.mrf.mxu0
  %v195 = vadd.f32 %v51, %v194
  %v196 = vpop.f32.mrf.mxu0
  %197 = vdwg.mxu0
  %198 = vst [vmem:[%s3] sm:$0xff] %v120
  %199 = vst [vmem:[%s3 + $0x8] sm:$0xff] %v125
  %200 = vst [vmem:[%s3 + $0x10] sm:$0xff] %v130
  %201 = vst [vmem:[%s3 + $0x18] sm:$0xff] %v135
  %202 = vst [vmem:[%s3 + $0x20] sm:$0xff] %v140
  %203 = vst [vmem:[%s3 + $0x28] sm:$0xff] %v145
  %204 = vst [vmem:[%s3 + $0x30] sm:$0xff] %v150
  %205 = vst [vmem:[%s3 + $0x38] sm:$0xff] %v155
  %206 = vst [vmem:[%s3 + $0x40] sm:$0xff] %v160
  %207 = vst [vmem:[%s3 + $0x48] sm:$0xff] %v165
  %208 = vst [vmem:[%s3 + $0x50] sm:$0xff] %v170
  %209 = vst [vmem:[%s3 + $0x58] sm:$0xff] %v175
  %210 = vst [vmem:[%s3 + $0x60] sm:$0xff] %v180
  %211 = vst [vmem:[%s3 + $0x68] sm:$0xff] %v185
  %212 = vst [vmem:[%s3 + $0x70] sm:$0xff] %v190
  %213 = vst [vmem:[%s3 + $0x78] sm:$0xff] %v195
  // Predicated region
  $region14: #{_forward.6} parent=0 // pred_check
    _
  $region15: #{_forward.6} parent=0 // pred_check_branch
    %215 = sbr.rel (0) target = $region17
  $region16: #{_forward.6} parent=0 // pred_region
    _
  $region17: #{_forward.6} parent=0 // pred_fallthru
    _
  // Predicated region
  $region18: #{_forward.6} parent=0 // pred_check
    _
  $region19: #{_forward.6} parent=0 // pred_check_branch
    %217 = sbr.rel (0) target = $region21
  $region20: #{_forward.6} parent=0 // pred_region
    _
  $region21: #{_forward.6} parent=0 // pred_fallthru
    _

// kernel: _forward.5
$region0: #{_forward.5}
  #allocation0 [shape = 'u32[]', space=smem, size = 0x4, offset = 0x4, fixed_abs, tag = 'smem constant byte address 0x4 - core index']
  #allocation1 [shape = 'u32[144,128]{1,0:T(1,128)}', space=vmem, size = 0x12000, scoped, tag = 'internal scratch']
  %s0 = inlined_call_operand.vmem [shape: f32[128,128], index: 0, kind: input, shape index: {}]
  %s1 = inlined_call_operand.vmem [shape: f32[128,128], index: 1, kind: input, shape index: {}]
  %s2 = inlined_call_operand.vmem [shape: f32[1,128], index: 2, kind: input, shape index: {}]
  %s3 = inlined_call_operand.vmem [shape: f32[128,128], index: 3, kind: output, shape index: {}]
  %s4 = sld [smem:[#allocation0]]
  $region22: #{_forward.5} parent=0
    _
  %s6 = ssub.s32 1, %s4
  %s7 = scalar_select 0, %s6, %s4
  // Predicated region
  $region2: #{_forward.5} parent=0 // pred_check
    _
  $region3: #{_forward.5} parent=0 // pred_check_branch
    %9 = sbr.rel (0) target = $region5
  $region4: #{_forward.5} parent=0 // pred_region
    _
  $region5: #{_forward.5} parent=0 // pred_fallthru
    _
  // Predicated region
  $region6: #{_forward.5} parent=0 // pred_check
    _
  $region7: #{_forward.5} parent=0 // pred_check_branch
    %11 = sbr.rel (0) target = $region9
  $region8: #{_forward.5} parent=0 // pred_region
    _
  $region9: #{_forward.5} parent=0 // pred_fallthru
    _
  // Predicated region
  $region10: #{_forward.5} parent=0 // pred_check
    _
  $region11: #{_forward.5} parent=0 // pred_check_branch
    %13 = sbr.rel (0) target = $region13
  $region12: #{_forward.5} parent=0 // pred_region
    _
  $region13: #{_forward.5} parent=0 // pred_fallthru
    _
  %v14 = vld [vmem:[%s0] sm:$0xff]
  %v15 = vld [vmem:[%s0 + $0x8] sm:$0xff]
  %v16 = vld [vmem:[%s0 + $0x10] sm:$0xff]
  %v17 = vld [vmem:[%s0 + $0x18] sm:$0xff]
  %v18 = vld [vmem:[%s0 + $0x20] sm:$0xff]
  %v19 = vld [vmem:[%s0 + $0x28] sm:$0xff]
  %v20 = vld [vmem:[%s0 + $0x30] sm:$0xff]
  %v21 = vld [vmem:[%s0 + $0x38] sm:$0xff]
  %v22 = vld [vmem:[%s0 + $0x40] sm:$0xff]
  %v23 = vld [vmem:[%s0 + $0x48] sm:$0xff]
  %v24 = vld [vmem:[%s0 + $0x50] sm:$0xff]
  %v25 = vld [vmem:[%s0 + $0x58] sm:$0xff]
  %v26 = vld [vmem:[%s0 + $0x60] sm:$0xff]
  %v27 = vld [vmem:[%s0 + $0x68] sm:$0xff]
  %v28 = vld [vmem:[%s0 + $0x70] sm:$0xff]
  %v29 = vld [vmem:[%s0 + $0x78] sm:$0xff]
  %v30 = vld [vmem:[%s1] sm:$0xff]
  %v31 = vld [vmem:[%s1 + $0x8] sm:$0xff]
  %v32 = vld [vmem:[%s1 + $0x10] sm:$0xff]
  %v33 = vld [vmem:[%s1 + $0x18] sm:$0xff]
  %v34 = vld [vmem:[%s1 + $0x20] sm:$0xff]
  %v35 = vld [vmem:[%s1 + $0x28] sm:$0xff]
  %v36 = vld [vmem:[%s1 + $0x30] sm:$0xff]
  %v37 = vld [vmem:[%s1 + $0x38] sm:$0xff]
  %v38 = vld [vmem:[%s1 + $0x40] sm:$0xff]
  %v39 = vld [vmem:[%s1 + $0x48] sm:$0xff]
  %v40 = vld [vmem:[%s1 + $0x50] sm:$0xff]
  %v41 = vld [vmem:[%s1 + $0x58] sm:$0xff]
  %v42 = vld [vmem:[%s1 + $0x60] sm:$0xff]
  %v43 = vld [vmem:[%s1 + $0x68] sm:$0xff]
  %v44 = vld [vmem:[%s1 + $0x70] sm:$0xff]
  %v45 = vld [vmem:[%s1 + $0x78] sm:$0xff]
  %v46 = vld [vmem:[%s2] sm:$0x1]
  %v48 = vlaneseq
  %v49 = vshrl.u32 %v48, 7
  %v50 = vsub.s32 0, %v49
  %v51 = vrot.slane %v46, %v50
  %53 = vmatprep.subr.mxu0 0.0
  %54 = vmatpush1.msra.mxu0 %v45
  %55 = vmatprep.subr.mxu0 0.0
  %56 = vmatpush1.msra.mxu0 %v44
  %57 = vmatprep.subr.mxu0 0.0
  %58 = vmatpush1.msra.mxu0 %v43
  %59 = vmatprep.subr.mxu0 0.0
  %60 = vmatpush1.msra.mxu0 %v42
  %61 = vmatprep.subr.mxu0 0.0
  %62 = vmatpush1.msra.mxu0 %v41
  %63 = vmatprep.subr.mxu0 0.0
  %64 = vmatpush1.msra.mxu0 %v40
  %65 = vmatprep.subr.mxu0 0.0
  %66 = vmatpush1.msra.mxu0 %v39
  %67 = vmatprep.subr.mxu0 0.0
  %68 = vmatpush1.msra.mxu0 %v38
  %69 = vmatprep.subr.mxu0 0.0
  %70 = vmatpush1.msra.mxu0 %v37
  %71 = vmatprep.subr.mxu0 0.0
  %72 = vmatpush1.msra.mxu0 %v36
  %73 = vmatprep.subr.mxu0 0.0
  %74 = vmatpush1.msra.mxu0 %v35
  %75 = vmatprep.subr.mxu0 0.0
  %76 = vmatpush1.msra.mxu0 %v34
  %77 = vmatprep.subr.mxu0 0.0
  %78 = vmatpush1.msra.mxu0 %v33
  %79 = vmatprep.subr.mxu0 0.0
  %80 = vmatpush1.msra.mxu0 %v32
  %81 = vmatprep.subr.mxu0 0.0
  %82 = vmatpush1.msra.mxu0 %v31
  %83 = vmatprep.subr.mxu0 0.0
  %84 = vmatpush1.msra.mxu0 %v30
  %85 = vmatprep.subr.mxu0 0.0
  %86 = vmatpush2.msra.mxu0 0.0
  %87 = vmatprep.subr.mxu0 0.0
  %88 = vmatpush2.msra.mxu0 0.0
  %89 = vmatprep.subr.mxu0 0.0
  %90 = vmatpush2.msra.mxu0 0.0
  %91 = vmatprep.subr.mxu0 0.0
  %92 = vmatpush2.msra.mxu0 0.0
  %93 = vmatprep.subr.mxu0 0.0
  %94 = vmatpush2.msra.mxu0 0.0
  %95 = vmatprep.subr.mxu0 0.0
  %96 = vmatpush2.msra.mxu0 0.0
  %97 = vmatprep.subr.mxu0 0.0
  %98 = vmatpush2.msra.mxu0 0.0
  %99 = vmatprep.subr.mxu0 0.0
  %100 = vmatpush2.msra.mxu0 0.0
  %101 = vmatprep.subr.mxu0 0.0
  %102 = vmatpush2.msra.mxu0 0.0
  %103 = vmatprep.subr.mxu0 0.0
  %104 = vmatpush2.msra.mxu0 0.0
  %105 = vmatprep.subr.mxu0 0.0
  %106 = vmatpush2.msra.mxu0 0.0
  %107 = vmatprep.subr.mxu0 0.0
  %108 = vmatpush2.msra.mxu0 0.0
  %109 = vmatprep.subr.mxu0 0.0
  %110 = vmatpush2.msra.mxu0 0.0
  %111 = vmatprep.subr.mxu0 0.0
  %112 = vmatpush2.msra.mxu0 0.0
  %113 = vmatprep.subr.mxu0 0.0
  %114 = vmatpush2.msra.mxu0 0.0
  %115 = vmatprep.subr.mxu0 0.0
  %116 = vmatpush2.msra.mxu0 0.0
  %117 = vmatprep.mubr.f32.mxu0 0.0
  %118 = vmatmul.mubr.f32.gmra.mxu0 %v14
  %v119 = vpop.f32.mrf.mxu0
  %v120 = vadd.f32 %v51, %v119
  %v121 = vpop.f32.mrf.mxu0
  %122 = vmatprep.mubr.f32.mxu0 0.0
  %123 = vmatmul.mubr.f32.gmra.mxu0 %v15
  %v124 = vpop.f32.mrf.mxu0
  %v125 = vadd.f32 %v51, %v124
  %v126 = vpop.f32.mrf.mxu0
  %127 = vmatprep.mubr.f32.mxu0 0.0
  %128 = vmatmul.mubr.f32.gmra.mxu0 %v16
  %v129 = vpop.f32.mrf.mxu0
  %v130 = vadd.f32 %v51, %v129
  %v131 = vpop.f32.mrf.mxu0
  %132 = vmatprep.mubr.f32.mxu0 0.0
  %133 = vmatmul.mubr.f32.gmra.mxu0 %v17
  %v134 = vpop.f32.mrf.mxu0
  %v135 = vadd.f32 %v51, %v134
  %v136 = vpop.f32.mrf.mxu0
  %137 = vmatprep.mubr.f32.mxu0 0.0
  %138 = vmatmul.mubr.f32.gmra.mxu0 %v18
  %v139 = vpop.f32.mrf.mxu0
  %v140 = vadd.f32 %v51, %v139
  %v141 = vpop.f32.mrf.mxu0
  %142 = vmatprep.mubr.f32.mxu0 0.0
  %143 = vmatmul.mubr.f32.gmra.mxu0 %v19
  %v144 = vpop.f32.mrf.mxu0
  %v145 = vadd.f32 %v51, %v144
  %v146 = vpop.f32.mrf.mxu0
  %147 = vmatprep.mubr.f32.mxu0 0.0
  %148 = vmatmul.mubr.f32.gmra.mxu0 %v20
  %v149 = vpop.f32.mrf.mxu0
  %v150 = vadd.f32 %v51, %v149
  %v151 = vpop.f32.mrf.mxu0
  %152 = vmatprep.mubr.f32.mxu0 0.0
  %153 = vmatmul.mubr.f32.gmra.mxu0 %v21
  %v154 = vpop.f32.mrf.mxu0
  %v155 = vadd.f32 %v51, %v154
  %v156 = vpop.f32.mrf.mxu0
  %157 = vmatprep.mubr.f32.mxu0 0.0
  %158 = vmatmul.mubr.f32.gmra.mxu0 %v22
  %v159 = vpop.f32.mrf.mxu0
  %v160 = vadd.f32 %v51, %v159
  %v161 = vpop.f32.mrf.mxu0
  %162 = vmatprep.mubr.f32.mxu0 0.0
  %163 = vmatmul.mubr.f32.gmra.mxu0 %v23
  %v164 = vpop.f32.mrf.mxu0
  %v165 = vadd.f32 %v51, %v164
  %v166 = vpop.f32.mrf.mxu0
  %167 = vmatprep.mubr.f32.mxu0 0.0
  %168 = vmatmul.mubr.f32.gmra.mxu0 %v24
  %v169 = vpop.f32.mrf.mxu0
  %v170 = vadd.f32 %v51, %v169
  %v171 = vpop.f32.mrf.mxu0
  %172 = vmatprep.mubr.f32.mxu0 0.0
  %173 = vmatmul.mubr.f32.gmra.mxu0 %v25
  %v174 = vpop.f32.mrf.mxu0
  %v175 = vadd.f32 %v51, %v174
  %v176 = vpop.f32.mrf.mxu0
  %177 = vmatprep.mubr.f32.mxu0 0.0
  %178 = vmatmul.mubr.f32.gmra.mxu0 %v26
  %v179 = vpop.f32.mrf.mxu0
  %v180 = vadd.f32 %v51, %v179
  %v181 = vpop.f32.mrf.mxu0
  %182 = vmatprep.mubr.f32.mxu0 0.0
  %183 = vmatmul.mubr.f32.gmra.mxu0 %v27
  %v184 = vpop.f32.mrf.mxu0
  %v185 = vadd.f32 %v51, %v184
  %v186 = vpop.f32.mrf.mxu0
  %187 = vmatprep.mubr.f32.mxu0 0.0
  %188 = vmatmul.mubr.f32.gmra.mxu0 %v28
  %v189 = vpop.f32.mrf.mxu0
  %v190 = vadd.f32 %v51, %v189
  %v191 = vpop.f32.mrf.mxu0
  %192 = vmatprep.mubr.f32.mxu0 0.0
  %193 = vmatmul.mubr.f32.gmra.mxu0 %v29
  %v194 = vpop.f32.mrf.mxu0
  %v195 = vadd.f32 %v51, %v194
  %v196 = vpop.f32.mrf.mxu0
  %197 = vdwg.mxu0
  %v198 = vmax.f32 %v120, 0.0
  %v199 = vmax.f32 %v125, 0.0
  %v200 = vmax.f32 %v130, 0.0
  %v201 = vmax.f32 %v135, 0.0
  %v202 = vmax.f32 %v140, 0.0
  %v203 = vmax.f32 %v145, 0.0
  %v204 = vmax.f32 %v150, 0.0
  %v205 = vmax.f32 %v155, 0.0
  %v206 = vmax.f32 %v160, 0.0
  %v207 = vmax.f32 %v165, 0.0
  %v208 = vmax.f32 %v170, 0.0
  %v209 = vmax.f32 %v175, 0.0
  %v210 = vmax.f32 %v180, 0.0
  %v211 = vmax.f32 %v185, 0.0
  %v212 = vmax.f32 %v190, 0.0
  %v213 = vmax.f32 %v195, 0.0
  %214 = vst [vmem:[%s3] sm:$0xff] %v198
  %215 = vst [vmem:[%s3 + $0x8] sm:$0xff] %v199
  %216 = vst [vmem:[%s3 + $0x10] sm:$0xff] %v200
  %217 = vst [vmem:[%s3 + $0x18] sm:$0xff] %v201
  %218 = vst [vmem:[%s3 + $0x20] sm:$0xff] %v202
  %219 = vst [vmem:[%s3 + $0x28] sm:$0xff] %v203
  %220 = vst [vmem:[%s3 + $0x30] sm:$0xff] %v204
  %221 = vst [vmem:[%s3 + $0x38] sm:$0xff] %v205
  %222 = vst [vmem:[%s3 + $0x40] sm:$0xff] %v206
  %223 = vst [vmem:[%s3 + $0x48] sm:$0xff] %v207
  %224 = vst [vmem:[%s3 + $0x50] sm:$0xff] %v208
  %225 = vst [vmem:[%s3 + $0x58] sm:$0xff] %v209
  %226 = vst [vmem:[%s3 + $0x60] sm:$0xff] %v210
  %227 = vst [vmem:[%s3 + $0x68] sm:$0xff] %v211
  %228 = vst [vmem:[%s3 + $0x70] sm:$0xff] %v212
  %229 = vst [vmem:[%s3 + $0x78] sm:$0xff] %v213
  // Predicated region
  $region14: #{_forward.5} parent=0 // pred_check
    _
  $region15: #{_forward.5} parent=0 // pred_check_branch
    %231 = sbr.rel (0) target = $region17
  $region16: #{_forward.5} parent=0 // pred_region
    _
  $region17: #{_forward.5} parent=0 // pred_fallthru
    _
  // Predicated region
  $region18: #{_forward.5} parent=0 // pred_check
    _
  $region19: #{_forward.5} parent=0 // pred_check_branch
    %233 = sbr.rel (0) target = $region21
  $region20: #{_forward.5} parent=0 // pred_region
    _
  $region21: #{_forward.5} parent=0 // pred_fallthru
    _

// kernel: _forward.4
$region0: #{_forward.4}
  #allocation0 [shape = 'u32[]', space=smem, size = 0x4, offset = 0x4, fixed_abs, tag = 'smem constant byte address 0x4 - core index']
  #allocation1 [shape = 'u32[144,128]{1,0:T(1,128)}', space=vmem, size = 0x12000, scoped, tag = 'internal scratch']
  #allocation2 [shape = 'f32[128,128]{1,0:T(8,128)}', space=vmem, size = 0x10000, scoped, tag = 'scratch operand']
  %s0 = inlined_call_operand.vmem [shape: bf16[128,128], index: 0, kind: input, shape index: {}]
  %s1 = inlined_call_operand.vmem [shape: bf16[128,128], index: 1, kind: input, shape index: {}]
  %s2 = inlined_call_operand.vmem [shape: f32[1,128], index: 2, kind: input, shape index: {}]
  %s3 = inlined_call_operand.vmem [shape: f32[128,128], index: 3, kind: output, shape index: {}]
  %s4 = sld [smem:[#allocation0]]
  $region30: #{_forward.4} parent=0
    _
  %s6 = ssub.s32 1, %s4
  %s7 = scalar_select 0, %s6, %s4
  // Predicated region
  $region2: #{_forward.4} parent=0 // pred_check
    _
  $region3: #{_forward.4} parent=0 // pred_check_branch
    %9 = sbr.rel (0) target = $region5
  $region4: #{_forward.4} parent=0 // pred_region
    _
  $region5: #{_forward.4} parent=0 // pred_fallthru
    _
  // Predicated region
  $region6: #{_forward.4} parent=0 // pred_check
    _
  $region7: #{_forward.4} parent=0 // pred_check_branch
    %11 = sbr.rel (0) target = $region9
  $region8: #{_forward.4} parent=0 // pred_region
    _
  $region9: #{_forward.4} parent=0 // pred_fallthru
    _
  // Predicated region
  $region10: #{_forward.4} parent=0 // pred_check
    _
  $region11: #{_forward.4} parent=0 // pred_check_branch
    %13 = sbr.rel (0) target = $region13
  $region12: #{_forward.4} parent=0 // pred_region
    _
  $region13: #{_forward.4} parent=0 // pred_fallthru
    _
  %p15 = scmp.eq.s32.totalorder 0, 0
  // Predicated region
  $region14: #{_forward.4} parent=0 // pred_check
    %p16 = pneg %p15
  $region15: #{_forward.4} parent=0 // pred_check_branch
    %18 = sbr.rel (%p16) target = $region17
  $region16: #{_forward.4} parent=0 // pred_region
    %19 = vst [vmem:[#allocation2] sm:$0xff] 0.0
    %20 = vst [vmem:[#allocation2 + $0x8] sm:$0xff] 0.0
    %21 = vst [vmem:[#allocation2 + $0x10] sm:$0xff] 0.0
    %22 = vst [vmem:[#allocation2 + $0x18] sm:$0xff] 0.0
    %23 = vst [vmem:[#allocation2 + $0x20] sm:$0xff] 0.0
    %24 = vst [vmem:[#allocation2 + $0x28] sm:$0xff] 0.0
    %25 = vst [vmem:[#allocation2 + $0x30] sm:$0xff] 0.0
    %26 = vst [vmem:[#allocation2 + $0x38] sm:$0xff] 0.0
    %27 = vst [vmem:[#allocation2 + $0x40] sm:$0xff] 0.0
    %28 = vst [vmem:[#allocation2 + $0x48] sm:$0xff] 0.0
    %29 = vst [vmem:[#allocation2 + $0x50] sm:$0xff] 0.0
    %30 = vst [vmem:[#allocation2 + $0x58] sm:$0xff] 0.0
    %31 = vst [vmem:[#allocation2 + $0x60] sm:$0xff] 0.0
    %32 = vst [vmem:[#allocation2 + $0x68] sm:$0xff] 0.0
    %33 = vst [vmem:[#allocation2 + $0x70] sm:$0xff] 0.0
    %34 = vst [vmem:[#allocation2 + $0x78] sm:$0xff] 0.0
  $region17: #{_forward.4} parent=0 // pred_fallthru
    _
  %v35 = vld [vmem:[#allocation2] sm:$0xff]
  %v36 = vld [vmem:[#allocation2 + $0x8] sm:$0xff]
  %v37 = vld [vmem:[#allocation2 + $0x10] sm:$0xff]
  %v38 = vld [vmem:[#allocation2 + $0x18] sm:$0xff]
  %v39 = vld [vmem:[#allocation2 + $0x20] sm:$0xff]
  %v40 = vld [vmem:[#allocation2 + $0x28] sm:$0xff]
  %v41 = vld [vmem:[#allocation2 + $0x30] sm:$0xff]
  %v42 = vld [vmem:[#allocation2 + $0x38] sm:$0xff]
  %v43 = vld [vmem:[#allocation2 + $0x40] sm:$0xff]
  %v44 = vld [vmem:[#allocation2 + $0x48] sm:$0xff]
  %v45 = vld [vmem:[#allocation2 + $0x50] sm:$0xff]
  %v46 = vld [vmem:[#allocation2 + $0x58] sm:$0xff]
  %v47 = vld [vmem:[#allocation2 + $0x60] sm:$0xff]
  %v48 = vld [vmem:[#allocation2 + $0x68] sm:$0xff]
  %v49 = vld [vmem:[#allocation2 + $0x70] sm:$0xff]
  %v50 = vld [vmem:[#allocation2 + $0x78] sm:$0xff]
  %v51 = vld [vmem:[%s0] sm:$0xf]
  %v52 = vld [vmem:[%s0 + $0x4] sm:$0xf]
  %v53 = vld [vmem:[%s0 + $0x8] sm:$0xf]
  %v54 = vld [vmem:[%s0 + $0xc] sm:$0xf]
  %v55 = vld [vmem:[%s0 + $0x10] sm:$0xf]
  %v56 = vld [vmem:[%s0 + $0x14] sm:$0xf]
  %v57 = vld [vmem:[%s0 + $0x18] sm:$0xf]
  %v58 = vld [vmem:[%s0 + $0x1c] sm:$0xf]
  %v59 = vld [vmem:[%s0 + $0x20] sm:$0xf]
  %v60 = vld [vmem:[%s0 + $0x24] sm:$0xf]
  %v61 = vld [vmem:[%s0 + $0x28] sm:$0xf]
  %v62 = vld [vmem:[%s0 + $0x2c] sm:$0xf]
  %v63 = vld [vmem:[%s0 + $0x30] sm:$0xf]
  %v64 = vld [vmem:[%s0 + $0x34] sm:$0xf]
  %v65 = vld [vmem:[%s0 + $0x38] sm:$0xf]
  %v66 = vld [vmem:[%s0 + $0x3c] sm:$0xf]
  %v67 = vld [vmem:[%s1] sm:$0xf]
  %v68 = vld [vmem:[%s1 + $0x4] sm:$0xf]
  %v69 = vld [vmem:[%s1 + $0x8] sm:$0xf]
  %v70 = vld [vmem:[%s1 + $0xc] sm:$0xf]
  %v71 = vld [vmem:[%s1 + $0x10] sm:$0xf]
  %v72 = vld [vmem:[%s1 + $0x14] sm:$0xf]
  %v73 = vld [vmem:[%s1 + $0x18] sm:$0xf]
  %v74 = vld [vmem:[%s1 + $0x1c] sm:$0xf]
  %v75 = vld [vmem:[%s1 + $0x20] sm:$0xf]
  %v76 = vld [vmem:[%s1 + $0x24] sm:$0xf]
  %v77 = vld [vmem:[%s1 + $0x28] sm:$0xf]
  %v78 = vld [vmem:[%s1 + $0x2c] sm:$0xf]
  %v79 = vld [vmem:[%s1 + $0x30] sm:$0xf]
  %v80 = vld [vmem:[%s1 + $0x34] sm:$0xf]
  %v81 = vld [vmem:[%s1 + $0x38] sm:$0xf]
  %v82 = vld [vmem:[%s1 + $0x3c] sm:$0xf]
  %v99 = vunpack.c.l.b16 %v51
  %v100 = vunpack.c.l.b16 %v52
  %v101 = vunpack.c.l.b16 %v53
  %v102 = vunpack.c.l.b16 %v54
  %v103 = vunpack.c.l.b16 %v55
  %v104 = vunpack.c.l.b16 %v56
  %v105 = vunpack.c.l.b16 %v57
  %v106 = vunpack.c.l.b16 %v58
  %v107 = vunpack.c.l.b16 %v59
  %v108 = vunpack.c.l.b16 %v60
  %v109 = vunpack.c.l.b16 %v61
  %v110 = vunpack.c.l.b16 %v62
  %v111 = vunpack.c.l.b16 %v63
  %v112 = vunpack.c.l.b16 %v64
  %v113 = vunpack.c.l.b16 %v65
  %v114 = vunpack.c.l.b16 %v66
  %v115 = vpack.c.b16 %v100, %v99
  %v116 = vpack.c.b16 %v102, %v101
  %v117 = vpack.c.b16 %v104, %v103
  %v118 = vpack.c.b16 %v106, %v105
  %v119 = vpack.c.b16 %v108, %v107
  %v120 = vpack.c.b16 %v110, %v109
  %v121 = vpack.c.b16 %v112, %v111
  %v122 = vpack.c.b16 %v114, %v113
  %v147 = vunpack.c.l.b16 %v67
  %v148 = vunpack.c.l.b16 %v68
  %v149 = vunpack.c.l.b16 %v69
  %v150 = vunpack.c.l.b16 %v70
  %v151 = vunpack.c.l.b16 %v71
  %v152 = vunpack.c.l.b16 %v72
  %v153 = vunpack.c.l.b16 %v73
  %v154 = vunpack.c.l.b16 %v74
  %v155 = vunpack.c.l.b16 %v75
  %v156 = vunpack.c.l.b16 %v76
  %v157 = vunpack.c.l.b16 %v77
  %v158 = vunpack.c.l.b16 %v78
  %v159 = vunpack.c.l.b16 %v79
  %v160 = vunpack.c.l.b16 %v80
  %v161 = vunpack.c.l.b16 %v81
  %v162 = vunpack.c.l.b16 %v82
  %v163 = vpack.c.b16 %v148, %v147
  %v164 = vpack.c.b16 %v150, %v149
  %v165 = vpack.c.b16 %v152, %v151
  %v166 = vpack.c.b16 %v154, %v153
  %v167 = vpack.c.b16 %v156, %v155
  %v168 = vpack.c.b16 %v158, %v157
  %v169 = vpack.c.b16 %v160, %v159
  %v170 = vpack.c.b16 %v162, %v161
  %179 = vmatprep.subr.bf16.mxu0 0
  %180 = vmatpush1.bf16.msra.mxu0 %v170
  %181 = vmatprep.subr.bf16.mxu0 0
  %182 = vmatpush1.bf16.msra.mxu0 %v169
  %183 = vmatprep.subr.bf16.mxu0 0
  %184 = vmatpush1.bf16.msra.mxu0 %v168
  %185 = vmatprep.subr.bf16.mxu0 0
  %186 = vmatpush1.bf16.msra.mxu0 %v167
  %187 = vmatprep.subr.bf16.mxu0 0
  %188 = vmatpush1.bf16.msra.mxu0 %v166
  %189 = vmatprep.subr.bf16.mxu0 0
  %190 = vmatpush1.bf16.msra.mxu0 %v165
  %191 = vmatprep.subr.bf16.mxu0 0
  %192 = vmatpush1.bf16.msra.mxu0 %v164
  %193 = vmatprep.subr.bf16.mxu0 0
  %194 = vmatpush1.bf16.msra.mxu0 %v163
  %195 = vmatprep.subr.bf16.mxu0 0
  %196 = vmatpush2.bf16.msra.mxu0 0
  %197 = vmatprep.subr.bf16.mxu0 0
  %198 = vmatpush2.bf16.msra.mxu0 0
  %199 = vmatprep.subr.bf16.mxu0 0
  %200 = vmatpush2.bf16.msra.mxu0 0
  %201 = vmatprep.subr.bf16.mxu0 0
  %202 = vmatpush2.bf16.msra.mxu0 0
  %203 = vmatprep.subr.bf16.mxu0 0
  %204 = vmatpush2.bf16.msra.mxu0 0
  %205 = vmatprep.subr.bf16.mxu0 0
  %206 = vmatpush2.bf16.msra.mxu0 0
  %207 = vmatprep.subr.bf16.mxu0 0
  %208 = vmatpush2.bf16.msra.mxu0 0
  %209 = vmatprep.subr.bf16.mxu0 0
  %210 = vmatpush2.bf16.msra.mxu0 0
  %211 = vmatprep.mubr.bf16.mxu0 0
  %212 = vmatmul.mubr.bf16.gmra.mxu0 %v115
  %v213 = vpop.f32.mrf.mxu0
  %v214 = vadd.f32 0.0, %v213
  %v215 = vpop.f32.mrf.mxu0
  %v216 = vpop.f32.mrf.mxu0
  %v217 = vadd.f32 0.0, %v216
  %v218 = vpop.f32.mrf.mxu0
  %219 = vmatprep.mubr.bf16.mxu0 0
  %220 = vmatmul.mubr.bf16.gmra.mxu0 %v116
  %v221 = vpop.f32.mrf.mxu0
  %v222 = vadd.f32 0.0, %v221
  %v223 = vpop.f32.mrf.mxu0
  %v224 = vpop.f32.mrf.mxu0
  %v225 = vadd.f32 0.0, %v224
  %v226 = vpop.f32.mrf.mxu0
  %227 = vmatprep.mubr.bf16.mxu0 0
  %228 = vmatmul.mubr.bf16.gmra.mxu0 %v117
  %v229 = vpop.f32.mrf.mxu0
  %v230 = vadd.f32 0.0, %v229
  %v231 = vpop.f32.mrf.mxu0
  %v232 = vpop.f32.mrf.mxu0
  %v233 = vadd.f32 0.0, %v232
  %v234 = vpop.f32.mrf.mxu0
  %235 = vmatprep.mubr.bf16.mxu0 0
  %236 = vmatmul.mubr.bf16.gmra.mxu0 %v118
  %v237 = vpop.f32.mrf.mxu0
  %v238 = vadd.f32 0.0, %v237
  %v239 = vpop.f32.mrf.mxu0
  %v240 = vpop.f32.mrf.mxu0
  %v241 = vadd.f32 0.0, %v240
  %v242 = vpop.f32.mrf.mxu0
  %243 = vmatprep.mubr.bf16.mxu0 0
  %244 = vmatmul.mubr.bf16.gmra.mxu0 %v119
  %v245 = vpop.f32.mrf.mxu0
  %v246 = vadd.f32 0.0, %v245
  %v247 = vpop.f32.mrf.mxu0
  %v248 = vpop.f32.mrf.mxu0
  %v249 = vadd.f32 0.0, %v248
  %v250 = vpop.f32.mrf.mxu0
  %251 = vmatprep.mubr.bf16.mxu0 0
  %252 = vmatmul.mubr.bf16.gmra.mxu0 %v120
  %v253 = vpop.f32.mrf.mxu0
  %v254 = vadd.f32 0.0, %v253
  %v255 = vpop.f32.mrf.mxu0
  %v256 = vpop.f32.mrf.mxu0
  %v257 = vadd.f32 0.0, %v256
  %v258 = vpop.f32.mrf.mxu0
  %259 = vmatprep.mubr.bf16.mxu0 0
  %260 = vmatmul.mubr.bf16.gmra.mxu0 %v121
  %v261 = vpop.f32.mrf.mxu0
  %v262 = vadd.f32 0.0, %v261
  %v263 = vpop.f32.mrf.mxu0
  %v264 = vpop.f32.mrf.mxu0
  %v265 = vadd.f32 0.0, %v264
  %v266 = vpop.f32.mrf.mxu0
  %267 = vmatprep.mubr.bf16.mxu0 0
  %268 = vmatmul.mubr.bf16.gmra.mxu0 %v122
  %v269 = vpop.f32.mrf.mxu0
  %v270 = vadd.f32 0.0, %v269
  %v271 = vpop.f32.mrf.mxu0
  %v272 = vpop.f32.mrf.mxu0
  %v273 = vadd.f32 0.0, %v272
  %v274 = vpop.f32.mrf.mxu0
  %275 = vdwg.mxu0
  %v276 = vadd.f32 %v35, %v214
  %v277 = vadd.f32 %v36, %v217
  %v278 = vadd.f32 %v37, %v222
  %v279 = vadd.f32 %v38, %v225
  %v280 = vadd.f32 %v39, %v230
  %v281 = vadd.f32 %v40, %v233
  %v282 = vadd.f32 %v41, %v238
  %v283 = vadd.f32 %v42, %v241
  %v284 = vadd.f32 %v43, %v246
  %v285 = vadd.f32 %v44, %v249
  %v286 = vadd.f32 %v45, %v254
  %v287 = vadd.f32 %v46, %v257
  %v288 = vadd.f32 %v47, %v262
  %v289 = vadd.f32 %v48, %v265
  %v290 = vadd.f32 %v49, %v270
  %v291 = vadd.f32 %v50, %v273
  %292 = vst [vmem:[#allocation2] sm:$0xff] %v276
  %293 = vst [vmem:[#allocation2 + $0x8] sm:$0xff] %v277
  %294 = vst [vmem:[#allocation2 + $0x10] sm:$0xff] %v278
  %295 = vst [vmem:[#allocation2 + $0x18] sm:$0xff] %v279
  %296 = vst [vmem:[#allocation2 + $0x20] sm:$0xff] %v280
  %297 = vst [vmem:[#allocation2 + $0x28] sm:$0xff] %v281
  %298 = vst [vmem:[#allocation2 + $0x30] sm:$0xff] %v282
  %299 = vst [vmem:[#allocation2 + $0x38] sm:$0xff] %v283
  %300 = vst [vmem:[#allocation2 + $0x40] sm:$0xff] %v284
  %301 = vst [vmem:[#allocation2 + $0x48] sm:$0xff] %v285
  %302 = vst [vmem:[#allocation2 + $0x50] sm:$0xff] %v286
  %303 = vst [vmem:[#allocation2 + $0x58] sm:$0xff] %v287
  %304 = vst [vmem:[#allocation2 + $0x60] sm:$0xff] %v288
  %305 = vst [vmem:[#allocation2 + $0x68] sm:$0xff] %v289
  %306 = vst [vmem:[#allocation2 + $0x70] sm:$0xff] %v290
  %307 = vst [vmem:[#allocation2 + $0x78] sm:$0xff] %v291
  // Predicated region
  $region18: #{_forward.4} parent=0 // pred_check
    %p308 = pneg %p15
  $region19: #{_forward.4} parent=0 // pred_check_branch
    %310 = sbr.rel (%p308) target = $region21
  $region20: #{_forward.4} parent=0 // pred_region
    %v311 = vld [vmem:[#allocation2] sm:$0xff]
    %v312 = vld [vmem:[#allocation2 + $0x8] sm:$0xff]
    %v313 = vld [vmem:[#allocation2 + $0x10] sm:$0xff]
    %v314 = vld [vmem:[#allocation2 + $0x18] sm:$0xff]
    %v315 = vld [vmem:[#allocation2 + $0x20] sm:$0xff]
    %v316 = vld [vmem:[#allocation2 + $0x28] sm:$0xff]
    %v317 = vld [vmem:[#allocation2 + $0x30] sm:$0xff]
    %v318 = vld [vmem:[#allocation2 + $0x38] sm:$0xff]
    %v319 = vld [vmem:[#allocation2 + $0x40] sm:$0xff]
    %v320 = vld [vmem:[#allocation2 + $0x48] sm:$0xff]
    %v321 = vld [vmem:[#allocation2 + $0x50] sm:$0xff]
    %v322 = vld [vmem:[#allocation2 + $0x58] sm:$0xff]
    %v323 = vld [vmem:[#allocation2 + $0x60] sm:$0xff]
    %v324 = vld [vmem:[#allocation2 + $0x68] sm:$0xff]
    %v325 = vld [vmem:[#allocation2 + $0x70] sm:$0xff]
    %v326 = vld [vmem:[#allocation2 + $0x78] sm:$0xff]
    %v327 = vld [vmem:[%s2] sm:$0x1]
    %v329 = vlaneseq
    %v330 = vshrl.u32 %v329, 7
    %v331 = vsub.s32 0, %v330
    %v332 = vrot.slane %v327, %v331
    %v334 = vadd.f32 %v311, %v332
    %v335 = vadd.f32 %v312, %v332
    %v336 = vadd.f32 %v313, %v332
    %v337 = vadd.f32 %v314, %v332
    %v338 = vadd.f32 %v315, %v332
    %v339 = vadd.f32 %v316, %v332
    %v340 = vadd.f32 %v317, %v332
    %v341 = vadd.f32 %v318, %v332
    %v342 = vadd.f32 %v319, %v332
    %v343 = vadd.f32 %v320, %v332
    %v344 = vadd.f32 %v321, %v332
    %v345 = vadd.f32 %v322, %v332
    %v346 = vadd.f32 %v323, %v332
    %v347 = vadd.f32 %v324, %v332
    %v348 = vadd.f32 %v325, %v332
    %v349 = vadd.f32 %v326, %v332
    %350 = vst [vmem:[%s3] sm:$0xff] %v334
    %351 = vst [vmem:[%s3 + $0x8] sm:$0xff] %v335
    %352 = vst [vmem:[%s3 + $0x10] sm:$0xff] %v336
    %353 = vst [vmem:[%s3 + $0x18] sm:$0xff] %v337
    %354 = vst [vmem:[%s3 + $0x20] sm:$0xff] %v338
    %355 = vst [vmem:[%s3 + $0x28] sm:$0xff] %v339
    %356 = vst [vmem:[%s3 + $0x30] sm:$0xff] %v340
    %357 = vst [vmem:[%s3 + $0x38] sm:$0xff] %v341
    %358 = vst [vmem:[%s3 + $0x40] sm:$0xff] %v342
    %359 = vst [vmem:[%s3 + $0x48] sm:$0xff] %v343
    %360 = vst [vmem:[%s3 + $0x50] sm:$0xff] %v344
    %361 = vst [vmem:[%s3 + $0x58] sm:$0xff] %v345
    %362 = vst [vmem:[%s3 + $0x60] sm:$0xff] %v346
    %363 = vst [vmem:[%s3 + $0x68] sm:$0xff] %v347
    %364 = vst [vmem:[%s3 + $0x70] sm:$0xff] %v348
    %365 = vst [vmem:[%s3 + $0x78] sm:$0xff] %v349
  $region21: #{_forward.4} parent=0 // pred_fallthru
    _
  // Predicated region
  $region22: #{_forward.4} parent=0 // pred_check
    _
  $region23: #{_forward.4} parent=0 // pred_check_branch
    %367 = sbr.rel (0) target = $region25
  $region24: #{_forward.4} parent=0 // pred_region
    _
  $region25: #{_forward.4} parent=0 // pred_fallthru
    _
  // Predicated region
  $region26: #{_forward.4} parent=0 // pred_check
    _
  $region27: #{_forward.4} parent=0 // pred_check_branch
    %369 = sbr.rel (0) target = $region29
  $region28: #{_forward.4} parent=0 // pred_region
    _
  $region29: #{_forward.4} parent=0 // pred_fallthru
    _

// kernel: _forward.7
$region0: #{_forward.7}
  #allocation0 [shape = 'u32[]', space=smem, size = 0x4, offset = 0x4, fixed_abs, tag = 'smem constant byte address 0x4 - core index']
  #allocation1 [shape = 'u32[144,128]{1,0:T(1,128)}', space=vmem, size = 0x12000, scoped, tag = 'internal scratch']
  #allocation2 [shape = 'f32[128,128]{1,0:T(8,128)}', space=vmem, size = 0x10000, scoped, tag = 'scratch operand']
  %s0 = inlined_call_operand.vmem [shape: bf16[128,128], index: 0, kind: input, shape index: {}]
  %s1 = inlined_call_operand.vmem [shape: bf16[128,128], index: 1, kind: input, shape index: {}]
  %s2 = inlined_call_operand.vmem [shape: f32[1,128], index: 2, kind: input, shape index: {}]
  %s3 = inlined_call_operand.vmem [shape: f32[128,128], index: 3, kind: output, shape index: {}]
  %s4 = sld [smem:[#allocation0]]
  $region30: #{_forward.7} parent=0
    _
  %s6 = ssub.s32 1, %s4
  %s7 = scalar_select 0, %s6, %s4
  // Predicated region
  $region2: #{_forward.7} parent=0 // pred_check
    _
  $region3: #{_forward.7} parent=0 // pred_check_branch
    %9 = sbr.rel (0) target = $region5
  $region4: #{_forward.7} parent=0 // pred_region
    _
  $region5: #{_forward.7} parent=0 // pred_fallthru
    _
  // Predicated region
  $region6: #{_forward.7} parent=0 // pred_check
    _
  $region7: #{_forward.7} parent=0 // pred_check_branch
    %11 = sbr.rel (0) target = $region9
  $region8: #{_forward.7} parent=0 // pred_region
    _
  $region9: #{_forward.7} parent=0 // pred_fallthru
    _
  // Predicated region
  $region10: #{_forward.7} parent=0 // pred_check
    _
  $region11: #{_forward.7} parent=0 // pred_check_branch
    %13 = sbr.rel (0) target = $region13
  $region12: #{_forward.7} parent=0 // pred_region
    _
  $region13: #{_forward.7} parent=0 // pred_fallthru
    _
  %p15 = scmp.eq.s32.totalorder 0, 0
  // Predicated region
  $region14: #{_forward.7} parent=0 // pred_check
    %p16 = pneg %p15
  $region15: #{_forward.7} parent=0 // pred_check_branch
    %18 = sbr.rel (%p16) target = $region17
  $region16: #{_forward.7} parent=0 // pred_region
    %19 = vst [vmem:[#allocation2] sm:$0xff] 0.0
    %20 = vst [vmem:[#allocation2 + $0x8] sm:$0xff] 0.0
    %21 = vst [vmem:[#allocation2 + $0x10] sm:$0xff] 0.0
    %22 = vst [vmem:[#allocation2 + $0x18] sm:$0xff] 0.0
    %23 = vst [vmem:[#allocation2 + $0x20] sm:$0xff] 0.0
    %24 = vst [vmem:[#allocation2 + $0x28] sm:$0xff] 0.0
    %25 = vst [vmem:[#allocation2 + $0x30] sm:$0xff] 0.0
    %26 = vst [vmem:[#allocation2 + $0x38] sm:$0xff] 0.0
    %27 = vst [vmem:[#allocation2 + $0x40] sm:$0xff] 0.0
    %28 = vst [vmem:[#allocation2 + $0x48] sm:$0xff] 0.0
    %29 = vst [vmem:[#allocation2 + $0x50] sm:$0xff] 0.0
    %30 = vst [vmem:[#allocation2 + $0x58] sm:$0xff] 0.0
    %31 = vst [vmem:[#allocation2 + $0x60] sm:$0xff] 0.0
    %32 = vst [vmem:[#allocation2 + $0x68] sm:$0xff] 0.0
    %33 = vst [vmem:[#allocation2 + $0x70] sm:$0xff] 0.0
    %34 = vst [vmem:[#allocation2 + $0x78] sm:$0xff] 0.0
  $region17: #{_forward.7} parent=0 // pred_fallthru
    _
  %v35 = vld [vmem:[#allocation2] sm:$0xff]
  %v36 = vld [vmem:[#allocation2 + $0x8] sm:$0xff]
  %v37 = vld [vmem:[#allocation2 + $0x10] sm:$0xff]
  %v38 = vld [vmem:[#allocation2 + $0x18] sm:$0xff]
  %v39 = vld [vmem:[#allocation2 + $0x20] sm:$0xff]
  %v40 = vld [vmem:[#allocation2 + $0x28] sm:$0xff]
  %v41 = vld [vmem:[#allocation2 + $0x30] sm:$0xff]
  %v42 = vld [vmem:[#allocation2 + $0x38] sm:$0xff]
  %v43 = vld [vmem:[#allocation2 + $0x40] sm:$0xff]
  %v44 = vld [vmem:[#allocation2 + $0x48] sm:$0xff]
  %v45 = vld [vmem:[#allocation2 + $0x50] sm:$0xff]
  %v46 = vld [vmem:[#allocation2 + $0x58] sm:$0xff]
  %v47 = vld [vmem:[#allocation2 + $0x60] sm:$0xff]
  %v48 = vld [vmem:[#allocation2 + $0x68] sm:$0xff]
  %v49 = vld [vmem:[#allocation2 + $0x70] sm:$0xff]
  %v50 = vld [vmem:[#allocation2 + $0x78] sm:$0xff]
  %v51 = vld [vmem:[%s0] sm:$0xf]
  %v52 = vld [vmem:[%s0 + $0x4] sm:$0xf]
  %v53 = vld [vmem:[%s0 + $0x8] sm:$0xf]
  %v54 = vld [vmem:[%s0 + $0xc] sm:$0xf]
  %v55 = vld [vmem:[%s0 + $0x10] sm:$0xf]
  %v56 = vld [vmem:[%s0 + $0x14] sm:$0xf]
  %v57 = vld [vmem:[%s0 + $0x18] sm:$0xf]
  %v58 = vld [vmem:[%s0 + $0x1c] sm:$0xf]
  %v59 = vld [vmem:[%s0 + $0x20] sm:$0xf]
  %v60 = vld [vmem:[%s0 + $0x24] sm:$0xf]
  %v61 = vld [vmem:[%s0 + $0x28] sm:$0xf]
  %v62 = vld [vmem:[%s0 + $0x2c] sm:$0xf]
  %v63 = vld [vmem:[%s0 + $0x30] sm:$0xf]
  %v64 = vld [vmem:[%s0 + $0x34] sm:$0xf]
  %v65 = vld [vmem:[%s0 + $0x38] sm:$0xf]
  %v66 = vld [vmem:[%s0 + $0x3c] sm:$0xf]
  %v67 = vld [vmem:[%s1] sm:$0xf]
  %v68 = vld [vmem:[%s1 + $0x4] sm:$0xf]
  %v69 = vld [vmem:[%s1 + $0x8] sm:$0xf]
  %v70 = vld [vmem:[%s1 + $0xc] sm:$0xf]
  %v71 = vld [vmem:[%s1 + $0x10] sm:$0xf]
  %v72 = vld [vmem:[%s1 + $0x14] sm:$0xf]
  %v73 = vld [vmem:[%s1 + $0x18] sm:$0xf]
  %v74 = vld [vmem:[%s1 + $0x1c] sm:$0xf]
  %v75 = vld [vmem:[%s1 + $0x20] sm:$0xf]
  %v76 = vld [vmem:[%s1 + $0x24] sm:$0xf]
  %v77 = vld [vmem:[%s1 + $0x28] sm:$0xf]
  %v78 = vld [vmem:[%s1 + $0x2c] sm:$0xf]
  %v79 = vld [vmem:[%s1 + $0x30] sm:$0xf]
  %v80 = vld [vmem:[%s1 + $0x34] sm:$0xf]
  %v81 = vld [vmem:[%s1 + $0x38] sm:$0xf]
  %v82 = vld [vmem:[%s1 + $0x3c] sm:$0xf]
  %v99 = vunpack.c.l.b16 %v51
  %v100 = vunpack.c.l.b16 %v52
  %v101 = vunpack.c.l.b16 %v53
  %v102 = vunpack.c.l.b16 %v54
  %v103 = vunpack.c.l.b16 %v55
  %v104 = vunpack.c.l.b16 %v56
  %v105 = vunpack.c.l.b16 %v57
  %v106 = vunpack.c.l.b16 %v58
  %v107 = vunpack.c.l.b16 %v59
  %v108 = vunpack.c.l.b16 %v60
  %v109 = vunpack.c.l.b16 %v61
  %v110 = vunpack.c.l.b16 %v62
  %v111 = vunpack.c.l.b16 %v63
  %v112 = vunpack.c.l.b16 %v64
  %v113 = vunpack.c.l.b16 %v65
  %v114 = vunpack.c.l.b16 %v66
  %v115 = vpack.c.b16 %v100, %v99
  %v116 = vpack.c.b16 %v102, %v101
  %v117 = vpack.c.b16 %v104, %v103
  %v118 = vpack.c.b16 %v106, %v105
  %v119 = vpack.c.b16 %v108, %v107
  %v120 = vpack.c.b16 %v110, %v109
  %v121 = vpack.c.b16 %v112, %v111
  %v122 = vpack.c.b16 %v114, %v113
  %v147 = vunpack.c.l.b16 %v67
  %v148 = vunpack.c.l.b16 %v68
  %v149 = vunpack.c.l.b16 %v69
  %v150 = vunpack.c.l.b16 %v70
  %v151 = vunpack.c.l.b16 %v71
  %v152 = vunpack.c.l.b16 %v72
  %v153 = vunpack.c.l.b16 %v73
  %v154 = vunpack.c.l.b16 %v74
  %v155 = vunpack.c.l.b16 %v75
  %v156 = vunpack.c.l.b16 %v76
  %v157 = vunpack.c.l.b16 %v77
  %v158 = vunpack.c.l.b16 %v78
  %v159 = vunpack.c.l.b16 %v79
  %v160 = vunpack.c.l.b16 %v80
  %v161 = vunpack.c.l.b16 %v81
  %v162 = vunpack.c.l.b16 %v82
  %v163 = vpack.c.b16 %v148, %v147
  %v164 = vpack.c.b16 %v150, %v149
  %v165 = vpack.c.b16 %v152, %v151
  %v166 = vpack.c.b16 %v154, %v153
  %v167 = vpack.c.b16 %v156, %v155
  %v168 = vpack.c.b16 %v158, %v157
  %v169 = vpack.c.b16 %v160, %v159
  %v170 = vpack.c.b16 %v162, %v161
  %179 = vmatprep.subr.bf16.mxu0 0
  %180 = vmatpush1.bf16.msra.mxu0 %v170
  %181 = vmatprep.subr.bf16.mxu0 0
  %182 = vmatpush1.bf16.msra.mxu0 %v169
  %183 = vmatprep.subr.bf16.mxu0 0
  %184 = vmatpush1.bf16.msra.mxu0 %v168
  %185 = vmatprep.subr.bf16.mxu0 0
  %186 = vmatpush1.bf16.msra.mxu0 %v167
  %187 = vmatprep.subr.bf16.mxu0 0
  %188 = vmatpush1.bf16.msra.mxu0 %v166
  %189 = vmatprep.subr.bf16.mxu0 0
  %190 = vmatpush1.bf16.msra.mxu0 %v165
  %191 = vmatprep.subr.bf16.mxu0 0
  %192 = vmatpush1.bf16.msra.mxu0 %v164
  %193 = vmatprep.subr.bf16.mxu0 0
  %194 = vmatpush1.bf16.msra.mxu0 %v163
  %195 = vmatprep.subr.bf16.mxu0 0
  %196 = vmatpush2.bf16.msra.mxu0 0
  %197 = vmatprep.subr.bf16.mxu0 0
  %198 = vmatpush2.bf16.msra.mxu0 0
  %199 = vmatprep.subr.bf16.mxu0 0
  %200 = vmatpush2.bf16.msra.mxu0 0
  %201 = vmatprep.subr.bf16.mxu0 0
  %202 = vmatpush2.bf16.msra.mxu0 0
  %203 = vmatprep.subr.bf16.mxu0 0
  %204 = vmatpush2.bf16.msra.mxu0 0
  %205 = vmatprep.subr.bf16.mxu0 0
  %206 = vmatpush2.bf16.msra.mxu0 0
  %207 = vmatprep.subr.bf16.mxu0 0
  %208 = vmatpush2.bf16.msra.mxu0 0
  %209 = vmatprep.subr.bf16.mxu0 0
  %210 = vmatpush2.bf16.msra.mxu0 0
  %211 = vmatprep.mubr.bf16.mxu0 0
  %212 = vmatmul.mubr.bf16.gmra.mxu0 %v115
  %v213 = vpop.f32.mrf.mxu0
  %v214 = vadd.f32 0.0, %v213
  %v215 = vpop.f32.mrf.mxu0
  %v216 = vpop.f32.mrf.mxu0
  %v217 = vadd.f32 0.0, %v216
  %v218 = vpop.f32.mrf.mxu0
  %219 = vmatprep.mubr.bf16.mxu0 0
  %220 = vmatmul.mubr.bf16.gmra.mxu0 %v116
  %v221 = vpop.f32.mrf.mxu0
  %v222 = vadd.f32 0.0, %v221
  %v223 = vpop.f32.mrf.mxu0
  %v224 = vpop.f32.mrf.mxu0
  %v225 = vadd.f32 0.0, %v224
  %v226 = vpop.f32.mrf.mxu0
  %227 = vmatprep.mubr.bf16.mxu0 0
  %228 = vmatmul.mubr.bf16.gmra.mxu0 %v117
  %v229 = vpop.f32.mrf.mxu0
  %v230 = vadd.f32 0.0, %v229
  %v231 = vpop.f32.mrf.mxu0
  %v232 = vpop.f32.mrf.mxu0
  %v233 = vadd.f32 0.0, %v232
  %v234 = vpop.f32.mrf.mxu0
  %235 = vmatprep.mubr.bf16.mxu0 0
  %236 = vmatmul.mubr.bf16.gmra.mxu0 %v118
  %v237 = vpop.f32.mrf.mxu0
  %v238 = vadd.f32 0.0, %v237
  %v239 = vpop.f32.mrf.mxu0
  %v240 = vpop.f32.mrf.mxu0
  %v241 = vadd.f32 0.0, %v240
  %v242 = vpop.f32.mrf.mxu0
  %243 = vmatprep.mubr.bf16.mxu0 0
  %244 = vmatmul.mubr.bf16.gmra.mxu0 %v119
  %v245 = vpop.f32.mrf.mxu0
  %v246 = vadd.f32 0.0, %v245
  %v247 = vpop.f32.mrf.mxu0
  %v248 = vpop.f32.mrf.mxu0
  %v249 = vadd.f32 0.0, %v248
  %v250 = vpop.f32.mrf.mxu0
  %251 = vmatprep.mubr.bf16.mxu0 0
  %252 = vmatmul.mubr.bf16.gmra.mxu0 %v120
  %v253 = vpop.f32.mrf.mxu0
  %v254 = vadd.f32 0.0, %v253
  %v255 = vpop.f32.mrf.mxu0
  %v256 = vpop.f32.mrf.mxu0
  %v257 = vadd.f32 0.0, %v256
  %v258 = vpop.f32.mrf.mxu0
  %259 = vmatprep.mubr.bf16.mxu0 0
  %260 = vmatmul.mubr.bf16.gmra.mxu0 %v121
  %v261 = vpop.f32.mrf.mxu0
  %v262 = vadd.f32 0.0, %v261
  %v263 = vpop.f32.mrf.mxu0
  %v264 = vpop.f32.mrf.mxu0
  %v265 = vadd.f32 0.0, %v264
  %v266 = vpop.f32.mrf.mxu0
  %267 = vmatprep.mubr.bf16.mxu0 0
  %268 = vmatmul.mubr.bf16.gmra.mxu0 %v122
  %v269 = vpop.f32.mrf.mxu0
  %v270 = vadd.f32 0.0, %v269
  %v271 = vpop.f32.mrf.mxu0
  %v272 = vpop.f32.mrf.mxu0
  %v273 = vadd.f32 0.0, %v272
  %v274 = vpop.f32.mrf.mxu0
  %275 = vdwg.mxu0
  %v276 = vadd.f32 %v35, %v214
  %v277 = vadd.f32 %v36, %v217
  %v278 = vadd.f32 %v37, %v222
  %v279 = vadd.f32 %v38, %v225
  %v280 = vadd.f32 %v39, %v230
  %v281 = vadd.f32 %v40, %v233
  %v282 = vadd.f32 %v41, %v238
  %v283 = vadd.f32 %v42, %v241
  %v284 = vadd.f32 %v43, %v246
  %v285 = vadd.f32 %v44, %v249
  %v286 = vadd.f32 %v45, %v254
  %v287 = vadd.f32 %v46, %v257
  %v288 = vadd.f32 %v47, %v262
  %v289 = vadd.f32 %v48, %v265
  %v290 = vadd.f32 %v49, %v270
  %v291 = vadd.f32 %v50, %v273
  %292 = vst [vmem:[#allocation2] sm:$0xff] %v276
  %293 = vst [vmem:[#allocation2 + $0x8] sm:$0xff] %v277
  %294 = vst [vmem:[#allocation2 + $0x10] sm:$0xff] %v278
  %295 = vst [vmem:[#allocation2 + $0x18] sm:$0xff] %v279
  %296 = vst [vmem:[#allocation2 + $0x20] sm:$0xff] %v280
  %297 = vst [vmem:[#allocation2 + $0x28] sm:$0xff] %v281
  %298 = vst [vmem:[#allocation2 + $0x30] sm:$0xff] %v282
  %299 = vst [vmem:[#allocation2 + $0x38] sm:$0xff] %v283
  %300 = vst [vmem:[#allocation2 + $0x40] sm:$0xff] %v284
  %301 = vst [vmem:[#allocation2 + $0x48] sm:$0xff] %v285
  %302 = vst [vmem:[#allocation2 + $0x50] sm:$0xff] %v286
  %303 = vst [vmem:[#allocation2 + $0x58] sm:$0xff] %v287
  %304 = vst [vmem:[#allocation2 + $0x60] sm:$0xff] %v288
  %305 = vst [vmem:[#allocation2 + $0x68] sm:$0xff] %v289
  %306 = vst [vmem:[#allocation2 + $0x70] sm:$0xff] %v290
  %307 = vst [vmem:[#allocation2 + $0x78] sm:$0xff] %v291
  // Predicated region
  $region18: #{_forward.7} parent=0 // pred_check
    %p308 = pneg %p15
  $region19: #{_forward.7} parent=0 // pred_check_branch
    %310 = sbr.rel (%p308) target = $region21
  $region20: #{_forward.7} parent=0 // pred_region
    %v311 = vld [vmem:[#allocation2] sm:$0xff]
    %v312 = vld [vmem:[#allocation2 + $0x8] sm:$0xff]
    %v313 = vld [vmem:[#allocation2 + $0x10] sm:$0xff]
    %v314 = vld [vmem:[#allocation2 + $0x18] sm:$0xff]
    %v315 = vld [vmem:[#allocation2 + $0x20] sm:$0xff]
    %v316 = vld [vmem:[#allocation2 + $0x28] sm:$0xff]
    %v317 = vld [vmem:[#allocation2 + $0x30] sm:$0xff]
    %v318 = vld [vmem:[#allocation2 + $0x38] sm:$0xff]
    %v319 = vld [vmem:[#allocation2 + $0x40] sm:$0xff]
    %v320 = vld [vmem:[#allocation2 + $0x48] sm:$0xff]
    %v321 = vld [vmem:[#allocation2 + $0x50] sm:$0xff]
    %v322 = vld [vmem:[#allocation2 + $0x58] sm:$0xff]
    %v323 = vld [vmem:[#allocation2 + $0x60] sm:$0xff]
    %v324 = vld [vmem:[#allocation2 + $0x68] sm:$0xff]
    %v325 = vld [vmem:[#allocation2 + $0x70] sm:$0xff]
    %v326 = vld [vmem:[#allocation2 + $0x78] sm:$0xff]
    %v327 = vld [vmem:[%s2] sm:$0x1]
    %v329 = vlaneseq
    %v330 = vshrl.u32 %v329, 7
    %v331 = vsub.s32 0, %v330
    %v332 = vrot.slane %v327, %v331
    %v334 = vadd.f32 %v311, %v332
    %v335 = vadd.f32 %v312, %v332
    %v336 = vadd.f32 %v313, %v332
    %v337 = vadd.f32 %v314, %v332
    %v338 = vadd.f32 %v315, %v332
    %v339 = vadd.f32 %v316, %v332
    %v340 = vadd.f32 %v317, %v332
    %v341 = vadd.f32 %v318, %v332
    %v342 = vadd.f32 %v319, %v332
    %v343 = vadd.f32 %v320, %v332
    %v344 = vadd.f32 %v321, %v332
    %v345 = vadd.f32 %v322, %v332
    %v346 = vadd.f32 %v323, %v332
    %v347 = vadd.f32 %v324, %v332
    %v348 = vadd.f32 %v325, %v332
    %v349 = vadd.f32 %v326, %v332
    %v350 = vlaneseq
    %v351 = vand.u32 %v350, 127
    %vm352 = vcmp.lt.s32.totalorder %v351, 4
    %v353 = vsel %vm352, %v334, -1e+30
    %v354 = vsel %vm352, %v335, -1e+30
    %v355 = vsel %vm352, %v336, -1e+30
    %v356 = vsel %vm352, %v337, -1e+30
    %v357 = vsel %vm352, %v338, -1e+30
    %v358 = vsel %vm352, %v339, -1e+30
    %v359 = vsel %vm352, %v340, -1e+30
    %v360 = vsel %vm352, %v341, -1e+30
    %v361 = vsel %vm352, %v342, -1e+30
    %v362 = vsel %vm352, %v343, -1e+30
    %v363 = vsel %vm352, %v344, -1e+30
    %v364 = vsel %vm352, %v345, -1e+30
    %v365 = vsel %vm352, %v346, -1e+30
    %v366 = vsel %vm352, %v347, -1e+30
    %v367 = vsel %vm352, %v348, -1e+30
    %v368 = vsel %vm352, %v349, -1e+30
    %369 = vmax.xlane.f32.xlu0 %v353
    %v370 = vpop.xlane.xlu0 %369
    %371 = vmax.xlane.f32.xlu0 %v354
    %v372 = vpop.xlane.xlu0 %371
    %373 = vmax.xlane.f32.xlu0 %v355
    %v374 = vpop.xlane.xlu0 %373
    %375 = vmax.xlane.f32.xlu0 %v356
    %v376 = vpop.xlane.xlu0 %375
    %377 = vmax.xlane.f32.xlu0 %v357
    %v378 = vpop.xlane.xlu0 %377
    %379 = vmax.xlane.f32.xlu0 %v358
    %v380 = vpop.xlane.xlu0 %379
    %381 = vmax.xlane.f32.xlu0 %v359
    %v382 = vpop.xlane.xlu0 %381
    %383 = vmax.xlane.f32.xlu0 %v360
    %v384 = vpop.xlane.xlu0 %383
    %385 = vmax.xlane.f32.xlu0 %v361
    %v386 = vpop.xlane.xlu0 %385
    %387 = vmax.xlane.f32.xlu0 %v362
    %v388 = vpop.xlane.xlu0 %387
    %389 = vmax.xlane.f32.xlu0 %v363
    %v390 = vpop.xlane.xlu0 %389
    %391 = vmax.xlane.f32.xlu0 %v364
    %v392 = vpop.xlane.xlu0 %391
    %393 = vmax.xlane.f32.xlu0 %v365
    %v394 = vpop.xlane.xlu0 %393
    %395 = vmax.xlane.f32.xlu0 %v366
    %v396 = vpop.xlane.xlu0 %395
    %397 = vmax.xlane.f32.xlu0 %v367
    %v398 = vpop.xlane.xlu0 %397
    %399 = vmax.xlane.f32.xlu0 %v368
    %v400 = vpop.xlane.xlu0 %399
    %v401 = vsub.f32 %v353, %v370
    %v402 = vsub.f32 %v354, %v372
    %v403 = vsub.f32 %v355, %v374
    %v404 = vsub.f32 %v356, %v376
    %v405 = vsub.f32 %v357, %v378
    %v406 = vsub.f32 %v358, %v380
    %v407 = vsub.f32 %v359, %v382
    %v408 = vsub.f32 %v360, %v384
    %v409 = vsub.f32 %v361, %v386
    %v410 = vsub.f32 %v362, %v388
    %v411 = vsub.f32 %v363, %v390
    %v412 = vsub.f32 %v364, %v392
    %v413 = vsub.f32 %v365, %v394
    %v414 = vsub.f32 %v366, %v396
    %v415 = vsub.f32 %v367, %v398
    %v416 = vsub.f32 %v368, %v400
    %v417 = vmul.f32 %v401, 1.442695
    %v418 = vpow.pop %v417
    %v419 = vmul.f32 %v402, 1.442695
    %v420 = vpow.pop %v419
    %v421 = vmul.f32 %v403, 1.442695
    %v422 = vpow.pop %v421
    %v423 = vmul.f32 %v404, 1.442695
    %v424 = vpow.pop %v423
    %v425 = vmul.f32 %v405, 1.442695
    %v426 = vpow.pop %v425
    %v427 = vmul.f32 %v406, 1.442695
    %v428 = vpow.pop %v427
    %v429 = vmul.f32 %v407, 1.442695
    %v430 = vpow.pop %v429
    %v431 = vmul.f32 %v408, 1.442695
    %v432 = vpow.pop %v431
    %v433 = vmul.f32 %v409, 1.442695
    %v434 = vpow.pop %v433
    %v435 = vmul.f32 %v410, 1.442695
    %v436 = vpow.pop %v435
    %v437 = vmul.f32 %v411, 1.442695
    %v438 = vpow.pop %v437
    %v439 = vmul.f32 %v412, 1.442695
    %v440 = vpow.pop %v439
    %v441 = vmul.f32 %v413, 1.442695
    %v442 = vpow.pop %v441
    %v443 = vmul.f32 %v414, 1.442695
    %v444 = vpow.pop %v443
    %v445 = vmul.f32 %v415, 1.442695
    %v446 = vpow.pop %v445
    %v447 = vmul.f32 %v416, 1.442695
    %v448 = vpow.pop %v447
    %449 = vadd.xlane.f32.xlu0 %v418
    %v450 = vpop.xlane.xlu0 %449
    %451 = vadd.xlane.f32.xlu0 %v420
    %v452 = vpop.xlane.xlu0 %451
    %453 = vadd.xlane.f32.xlu0 %v422
    %v454 = vpop.xlane.xlu0 %453
    %455 = vadd.xlane.f32.xlu0 %v424
    %v456 = vpop.xlane.xlu0 %455
    %457 = vadd.xlane.f32.xlu0 %v426
    %v458 = vpop.xlane.xlu0 %457
    %459 = vadd.xlane.f32.xlu0 %v428
    %v460 = vpop.xlane.xlu0 %459
    %461 = vadd.xlane.f32.xlu0 %v430
    %v462 = vpop.xlane.xlu0 %461
    %463 = vadd.xlane.f32.xlu0 %v432
    %v464 = vpop.xlane.xlu0 %463
    %465 = vadd.xlane.f32.xlu0 %v434
    %v466 = vpop.xlane.xlu0 %465
    %467 = vadd.xlane.f32.xlu0 %v436
    %v468 = vpop.xlane.xlu0 %467
    %469 = vadd.xlane.f32.xlu0 %v438
    %v470 = vpop.xlane.xlu0 %469
    %471 = vadd.xlane.f32.xlu0 %v440
    %v472 = vpop.xlane.xlu0 %471
    %473 = vadd.xlane.f32.xlu0 %v442
    %v474 = vpop.xlane.xlu0 %473
    %475 = vadd.xlane.f32.xlu0 %v444
    %v476 = vpop.xlane.xlu0 %475
    %477 = vadd.xlane.f32.xlu0 %v446
    %v478 = vpop.xlane.xlu0 %477
    %479 = vadd.xlane.f32.xlu0 %v448
    %v480 = vpop.xlane.xlu0 %479
    %v481 = vlog2.pop %v450
    %v482 = vmul.f32 %v481, 0.6931472
    %v483 = vlog2.pop %v452
    %v484 = vmul.f32 %v483, 0.6931472
    %v485 = vlog2.pop %v454
    %v486 = vmul.f32 %v485, 0.6931472
    %v487 = vlog2.pop %v456
    %v488 = vmul.f32 %v487, 0.6931472
    %v489 = vlog2.pop %v458
    %v490 = vmul.f32 %v489, 0.6931472
    %v491 = vlog2.pop %v460
    %v492 = vmul.f32 %v491, 0.6931472
    %v493 = vlog2.pop %v462
    %v494 = vmul.f32 %v493, 0.6931472
    %v495 = vlog2.pop %v464
    %v496 = vmul.f32 %v495, 0.6931472
    %v497 = vlog2.pop %v466
    %v498 = vmul.f32 %v497, 0.6931472
    %v499 = vlog2.pop %v468
    %v500 = vmul.f32 %v499, 0.6931472
    %v501 = vlog2.pop %v470
    %v502 = vmul.f32 %v501, 0.6931472
    %v503 = vlog2.pop %v472
    %v504 = vmul.f32 %v503, 0.6931472
    %v505 = vlog2.pop %v474
    %v506 = vmul.f32 %v505, 0.6931472
    %v507 = vlog2.pop %v476
    %v508 = vmul.f32 %v507, 0.6931472
    %v509 = vlog2.pop %v478
    %v510 = vmul.f32 %v509, 0.6931472
    %v511 = vlog2.pop %v480
    %v512 = vmul.f32 %v511, 0.6931472
    %v513 = vsub.f32 %v401, %v482
    %v514 = vsub.f32 %v402, %v484
    %v515 = vsub.f32 %v403, %v486
    %v516 = vsub.f32 %v404, %v488
    %v517 = vsub.f32 %v405, %v490
    %v518 = vsub.f32 %v406, %v492
    %v519 = vsub.f32 %v407, %v494
    %v520 = vsub.f32 %v408, %v496
    %v521 = vsub.f32 %v409, %v498
    %v522 = vsub.f32 %v410, %v500
    %v523 = vsub.f32 %v411, %v502
    %v524 = vsub.f32 %v412, %v504
    %v525 = vsub.f32 %v413, %v506
    %v526 = vsub.f32 %v414, %v508
    %v527 = vsub.f32 %v415, %v510
    %v528 = vsub.f32 %v416, %v512
    %529 = vst [vmem:[%s3] sm:$0xff] %v513
    %530 = vst [vmem:[%s3 + $0x8] sm:$0xff] %v514
    %531 = vst [vmem:[%s3 + $0x10] sm:$0xff] %v515
    %532 = vst [vmem:[%s3 + $0x18] sm:$0xff] %v516
    %533 = vst [vmem:[%s3 + $0x20] sm:$0xff] %v517
    %534 = vst [vmem:[%s3 + $0x28] sm:$0xff] %v518
    %535 = vst [vmem:[%s3 + $0x30] sm:$0xff] %v519
    %536 = vst [vmem:[%s3 + $0x38] sm:$0xff] %v520
    %537 = vst [vmem:[%s3 + $0x40] sm:$0xff] %v521
    %538 = vst [vmem:[%s3 + $0x48] sm:$0xff] %v522
    %539 = vst [vmem:[%s3 + $0x50] sm:$0xff] %v523
    %540 = vst [vmem:[%s3 + $0x58] sm:$0xff] %v524
    %541 = vst [vmem:[%s3 + $0x60] sm:$0xff] %v525
    %542 = vst [vmem:[%s3 + $0x68] sm:$0xff] %v526
    %543 = vst [vmem:[%s3 + $0x70] sm:$0xff] %v527
    %544 = vst [vmem:[%s3 + $0x78] sm:$0xff] %v528
  $region21: #{_forward.7} parent=0 // pred_fallthru
    _
  // Predicated region
  $region22: #{_forward.7} parent=0 // pred_check
    _
  $region23: #{_forward.7} parent=0 // pred_check_branch
    %546 = sbr.rel (0) target = $region25
  $region24: #{_forward.7} parent=0 // pred_region
    _
  $region25: #{_forward.7} parent=0 // pred_fallthru
    _
  // Predicated region
  $region26: #{_forward.7} parent=0 // pred_check
    _
  $region27: #{_forward.7} parent=0 // pred_check_branch
    %548 = sbr.rel (0) target = $region29
  $region28: #{_forward.7} parent=0 // pred_region
    _
  $region29: #{_forward.7} parent=0 // pred_fallthru
    _

</llo_original>
